<compile_context>
chip_gen: v5e
topology: v5e:2x2
jax: 0.10.0
libtpu: 0.0.40
codegen_flags: <defaults>
</compile_context>

<pallas_src>
import jax
import jax.numpy as jnp
from jax.experimental import pallas as pl
from jax.experimental.pallas import tpu as pltpu

ACTION_SIZE = 4101
STATE_SIZE = 64 + 4101   # = 4165
HIDDEN_SIZE = 128

_LANE = 128
_SUBLANE = 8


def _round_up(n, m):
    return (n + m - 1) // m * m


STATE_PAD = _round_up(STATE_SIZE, _LANE)    # 4224
ACTION_PAD = _round_up(ACTION_SIZE, _LANE)  # 4224 = 33 * 128
ACTION_TILE = ACTION_PAD // 3               # 1408 = 11 * 128


def _vmem_capacity_bytes():
    try:
        info = pltpu.get_tpu_info()
        for name in ("vmem_capacity_bytes", "vmem_size_bytes", "vmem_bytes"):
            v = getattr(info, name, None)
            if v:
                return int(v)
    except Exception:
        pass
    return 64 * 1024 * 1024  # conservative fallback: v7x per-TC VMEM


def _tile_config():
    vmem_cap = _vmem_capacity_bytes()
    if vmem_cap >= 128 * 1024 * 1024:       # v5e / v6e: big VMEM -> big batch tiles
        return 512, 96 * 1024 * 1024
    return 256, 48 * 1024 * 1024            # v7x (64 MiB per TC) or unknown


def _mlp_kernel(x_ref, w1_ref, b1_ref, w2_ref, b2_ref, w3_ref, b3_ref,
                o_ref, h2_ref):
    # Layers 1-2 run once per batch tile (first N tile); h2 lives in a VMEM
    # scratch across the output (N) axis so only w3/b3/out stream on it.
    @pl.when(pl.program_id(1) == 0)
    def _():
        x = x_ref[...].astype(w1_ref.dtype)
        h1 = jnp.dot(x, w1_ref[...], preferred_element_type=jnp.float32)
        h1 = jnp.maximum(h1 + b1_ref[...].astype(jnp.float32), 0.0)
        h1 = h1.astype(w2_ref.dtype)
        h2 = jnp.dot(h1, w2_ref[...], preferred_element_type=jnp.float32)
        h2_ref[...] = jnp.maximum(h2 + b2_ref[...].astype(jnp.float32), 0.0)

    h2 = h2_ref[...].astype(w3_ref.dtype)
    y = jnp.dot(h2, w3_ref[...], preferred_element_type=jnp.float32)
    o_ref[...] = (y + b3_ref[...].astype(jnp.float32)).astype(o_ref.dtype)


def chess_qnetwork_naive_forward(x, kparams, *, tb_max=None, vmem_limit_bytes=None):
    """x: [B, STATE_SIZE] float32.  kparams: output of prepare_params()
    (weights pre-transposed to [in, out] and lane-padded ONCE at init)."""
    B = x.shape[0]
    w1, b1 = kparams["w1"], kparams["b1"]
    w2, b2 = kparams["w2"], kparams["b2"]
    w3, b3 = kparams["w3"], kparams["b3"]
    dtype = w1.dtype

    if tb_max is None or vmem_limit_bytes is None:
        tb_auto, vmem_auto = _tile_config()
        tb_max = tb_max or tb_auto
        vmem_limit_bytes = vmem_limit_bytes or vmem_auto

    # Adaptive batch tile: small batches get one tight tile; larger batches
    # pick the candidate that bounds batch-padding waste (HBM-bound kernel).
    if B <= tb_max:
        TB = max(_SUBLANE, _round_up(B, _SUBLANE))
    else:
        candidates = sorted({tb_max, max(128, tb_max // 2), 128}, reverse=True)
        TB = min(candidates, key=lambda t: (_round_up(B, t), -t))
    B_pad = _round_up(B, TB)
    n_b = B_pad // TB

    # N tiling: single batch tile (inference) -> pipeline w3 streaming against
    # compute; multiple batch tiles -> keep w3 resident (fetched exactly once).
    TN = ACTION_TILE if n_b == 1 else ACTION_PAD
    n_n = ACTION_PAD // TN

    # Single fused pad (+ optional cast to the weight storage dtype) of x.
    x_p = jnp.pad(x, ((0, B_pad - B), (0, STATE_PAD - STATE_SIZE))).astype(dtype)

    itemsize = jnp.dtype(dtype).itemsize
    flops = 2 * B_pad * (STATE_PAD * HIDDEN_SIZE + HIDDEN_SIZE * HIDDEN_SIZE
                         + HIDDEN_SIZE * ACTION_PAD)
    bytes_accessed = (
        itemsize * (STATE_PAD * HIDDEN_SIZE + HIDDEN_SIZE * HIDDEN_SIZE
                    + HIDDEN_SIZE * ACTION_PAD + 2 * HIDDEN_SIZE + ACTION_PAD)
        + itemsize * B_pad * STATE_PAD
        + 4 * B_pad * ACTION_PAD)
    cost = pl.CostEstimate(flops=flops, transcendentals=0,
                           bytes_accessed=bytes_accessed)

    const = lambda i, j: (0, 0)  # resident weights/biases: same block every step
    out = pl.pallas_call(
        _mlp_kernel,
        out_shape=jax.ShapeDtypeStruct((B_pad, ACTION_PAD), jnp.float32),
        grid=(n_b, n_n),
        in_specs=[
            pl.BlockSpec((TB, STATE_PAD), lambda i, j: (i, 0)),
            pl.BlockSpec((STATE_PAD, HIDDEN_SIZE), const),
            pl.BlockSpec((1, HIDDEN_SIZE), const),
            pl.BlockSpec((HIDDEN_SIZE, HIDDEN_SIZE), const),
            pl.BlockSpec((1, HIDDEN_SIZE), const),
            pl.BlockSpec((HIDDEN_SIZE, TN), lambda i, j: (0, j)),
            pl.BlockSpec((1, TN), lambda i, j: (0, j)),
        ],
        out_specs=pl.BlockSpec((TB, TN), lambda i, j: (i, j)),
        scratch_shapes=[pltpu.VMEM((TB, HIDDEN_SIZE), jnp.float32)],
        compiler_params=pltpu.CompilerParams(
            # TODO(synk): on v7x, use pltpu.CORE_PARALLEL on the batch axis for a
            # guaranteed 2-TensorCore split; plain "parallel" is kept so the same
            # code compiles on single-core v5e/v6e.
            dimension_semantics=("parallel", "arbitrary"),
            vmem_limit_bytes=vmem_limit_bytes,
        ),
        cost_estimate=cost,
    )(x_p, w1, b1, w2, b2, w3, b3)

    # TODO(synk): for large-B training loops, let consumers accept the padded
    # (B_pad, ACTION_PAD) layout directly to avoid this extra HBM pass.
    return out[:B, :ACTION_SIZE]


def init_torch_params(key):
    """torch.nn.Linear-style params: W [out, in], b [out], U(-1/sqrt(fan_in), +)."""
    ks = jax.random.split(key, 6)

    def linear(kw, kb, fan_in, fan_out):
        bound = float(fan_in) ** -0.5
        w = jax.random.uniform(kw, (fan_out, fan_in), jnp.float32, -bound, bound)
        b = jax.random.uniform(kb, (fan_out,), jnp.float32, -bound, bound)
        return w, b

    w1, b1 = linear(ks[0], ks[1], STATE_SIZE, HIDDEN_SIZE)
    w2, b2 = linear(ks[2], ks[3], HIDDEN_SIZE, HIDDEN_SIZE)
    w3, b3 = linear(ks[4], ks[5], HIDDEN_SIZE, ACTION_SIZE)
    return {"w1": w1, "b1": b1, "w2": w2, "b2": b2, "w3": w3, "b3": b3}


def prepare_params(tp, dtype=jnp.float32):
    """One-time conversion to kernel layout: transpose to [in, out], lane-pad
    ragged dims to multiples of 128, optional bf16 storage (f32 accumulation
    happens inside the kernel).  Do this once at init, NOT per forward."""
    w1 = jnp.pad(tp["w1"].T, ((0, STATE_PAD - STATE_SIZE), (0, 0))).astype(dtype)
    b1 = tp["b1"].reshape(1, HIDDEN_SIZE).astype(dtype)
    w2 = tp["w2"].T.astype(dtype)
    b2 = tp["b2"].reshape(1, HIDDEN_SIZE).astype(dtype)
    w3 = jnp.pad(tp["w3"].T, ((0, 0), (0, ACTION_PAD - ACTION_SIZE))).astype(dtype)
    b3 = jnp.pad(tp["b3"].reshape(1, ACTION_SIZE),
                 ((0, 0), (0, ACTION_PAD - ACTION_SIZE))).astype(dtype)
    return {"w1": w1, "b1": b1, "w2": w2, "b2": b2, "w3": w3, "b3": b3}


def reference_forward(x, tp):
    h1 = jnp.maximum(x @ tp["w1"].T + tp["b1"], 0.0)
    h2 = jnp.maximum(h1 @ tp["w2"].T + tp["b2"], 0.0)
    return h2 @ tp["w3"].T + tp["b3"]


if __name__ == "__main__":
    key = jax.random.PRNGKey(0)
    kx, kp = jax.random.split(key)

    B = 2
    x = jax.random.normal(kx, (B, STATE_SIZE), jnp.float32)
    tparams = init_torch_params(kp)
    ref = reference_forward(x, tparams)

    fwd = jax.jit(chess_qnetwork_naive_forward)

    # f32 storage path (matches the PyTorch module numerics).
    kparams_f32 = prepare_params(tparams, jnp.float32)
    out = jax.block_until_ready(fwd(x, kparams_f32))
    assert out.shape == (B, ACTION_SIZE)
    assert jnp.allclose(out, ref, atol=1e-4, rtol=1e-4)

    # bf16 weight/activation storage path (halves HBM streaming; f32 accumulate).
    kparams_bf16 = prepare_params(tparams, jnp.bfloat16)
    out_bf16 = jax.block_until_ready(fwd(x, kparams_bf16))
    assert out_bf16.shape == (B, ACTION_SIZE)
    assert jnp.allclose(out_bf16, ref, atol=5e-2, rtol=5e-2)

    print("KERNEL_OK")
</pallas_src>

<mosaic_0001>
module attributes {stable_mosaic.version = 11 : i64} {
  func.func @_mlp_kernel(%arg0: i32, %arg1: i32, %arg2: memref<8x4224xf32, #tpu.memory_space<vmem>>, %arg3: memref<4224x128xf32, #tpu.memory_space<vmem>>, %arg4: memref<1x128xf32, #tpu.memory_space<vmem>>, %arg5: memref<128x128xf32, #tpu.memory_space<vmem>>, %arg6: memref<1x128xf32, #tpu.memory_space<vmem>>, %arg7: memref<128x1408xf32, #tpu.memory_space<vmem>>, %arg8: memref<1x1408xf32, #tpu.memory_space<vmem>>, %arg9: memref<8x1408xf32, #tpu.memory_space<vmem>>, %arg10: memref<8x128xf32, #tpu.memory_space<vmem>>) attributes {dimension_semantics = [#tpu.dimension_semantics<parallel>, #tpu.dimension_semantics<arbitrary>], iteration_bounds = array<i64: 1, 3>, scalar_prefetch = 0 : i64, scratch_operands = 1 : i64, tpu.core_type = #tpu.core_type<tc>, window_params = [{transform_indices = @transform_0, window_bounds = array<i64: 8, 4224>}, {pipeline_mode = #tpu.pipeline_mode<synchronous>, transform_indices = @transform_1, window_bounds = array<i64: 4224, 128>}, {pipeline_mode = #tpu.pipeline_mode<synchronous>, transform_indices = @transform_2, window_bounds = array<i64: 1, 128>}, {pipeline_mode = #tpu.pipeline_mode<synchronous>, transform_indices = @transform_3, window_bounds = array<i64: 128, 128>}, {pipeline_mode = #tpu.pipeline_mode<synchronous>, transform_indices = @transform_4, window_bounds = array<i64: 1, 128>}, {transform_indices = @transform_5, window_bounds = array<i64: 128, 1408>}, {transform_indices = @transform_6, window_bounds = array<i64: 1, 1408>}, {transform_indices = @transform_7, window_bounds = array<i64: 8, 1408>}]} {
    %c0_i32 = arith.constant 0 : i32
    %0 = arith.cmpi eq, %arg1, %c0_i32 : i32
    %1 = arith.extui %0 : i1 to i32
    %c0_i32_0 = arith.constant 0 : i32
    %2 = arith.cmpi ne, %1, %c0_i32_0 : i32
    scf.if %2 {
      %c0_8 = arith.constant 0 : index
      %c0_9 = arith.constant 0 : index
      %10 = vector.load %arg2[%c0_8, %c0_9] : memref<8x4224xf32, #tpu.memory_space<vmem>>, vector<8x4224xf32>
      %c0_10 = arith.constant 0 : index
      %c0_11 = arith.constant 0 : index
      %11 = vector.load %arg3[%c0_10, %c0_11] : memref<4224x128xf32, #tpu.memory_space<vmem>>, vector<4224x128xf32>
      %cst_12 = arith.constant dense<0.000000e+00> : vector<8x128xf32>
      %12 = tpu.matmul %10, %11, %cst_12 {dimension_numbers = #tpu.dot_dimension_numbers<[1], [0], [0], [1], [0, 0, 1, 1], [], []>} : vector<8x4224xf32>, vector<4224x128xf32>, vector<8x128xf32> -> vector<8x128xf32>
      %c0_13 = arith.constant 0 : index
      %c0_14 = arith.constant 0 : index
      %13 = vector.load %arg4[%c0_13, %c0_14] : memref<1x128xf32, #tpu.memory_space<vmem>>, vector<1x128xf32>
      %14 = vector.broadcast %13 : vector<1x128xf32> to vector<8x128xf32>
      %15 = arith.addf %12, %14 : vector<8x128xf32>
      %cst_15 = arith.constant 0.000000e+00 : f32
      %16 = vector.broadcast %cst_15 : f32 to vector<8x128xf32>
      %17 = arith.maximumf %15, %16 : vector<8x128xf32>
      %c0_16 = arith.constant 0 : index
      %c0_17 = arith.constant 0 : index
      %18 = vector.load %arg5[%c0_16, %c0_17] : memref<128x128xf32, #tpu.memory_space<vmem>>, vector<128x128xf32>
      %cst_18 = arith.constant dense<0.000000e+00> : vector<8x128xf32>
      %19 = tpu.matmul %17, %18, %cst_18 {dimension_numbers = #tpu.dot_dimension_numbers<[1], [0], [0], [1], [0, 0, 1, 1], [], []>} : vector<8x128xf32>, vector<128x128xf32>, vector<8x128xf32> -> vector<8x128xf32>
      %c0_19 = arith.constant 0 : index
      %c0_20 = arith.constant 0 : index
      %20 = vector.load %arg6[%c0_19, %c0_20] : memref<1x128xf32, #tpu.memory_space<vmem>>, vector<1x128xf32>
      %21 = vector.broadcast %20 : vector<1x128xf32> to vector<8x128xf32>
      %22 = arith.addf %19, %21 : vector<8x128xf32>
      %cst_21 = arith.constant 0.000000e+00 : f32
      %23 = vector.broadcast %cst_21 : f32 to vector<8x128xf32>
      %24 = arith.maximumf %22, %23 : vector<8x128xf32>
      %c0_22 = arith.constant 0 : index
      %c0_23 = arith.constant 0 : index
      %25 = vector.load %arg10[%c0_22, %c0_23] : memref<8x128xf32, #tpu.memory_space<vmem>>, vector<8x128xf32>
      tpu.vector_store %arg10[%c0_22, %c0_23], %24 {strides = array<i32>} : memref<8x128xf32, #tpu.memory_space<vmem>>, vector<8x128xf32>,
    } else {
    }
    %c0 = arith.constant 0 : index
    %c0_1 = arith.constant 0 : index
    %3 = vector.load %arg10[%c0, %c0_1] : memref<8x128xf32, #tpu.memory_space<vmem>>, vector<8x128xf32>
    %c0_2 = arith.constant 0 : index
    %c0_3 = arith.constant 0 : index
    %4 = vector.load %arg7[%c0_2, %c0_3] : memref<128x1408xf32, #tpu.memory_space<vmem>>, vector<128x1408xf32>
    %cst = arith.constant dense<0.000000e+00> : vector<8x1408xf32>
    %5 = tpu.matmul %3, %4, %cst {dimension_numbers = #tpu.dot_dimension_numbers<[1], [0], [0], [1], [0, 0, 1, 1], [], []>} : vector<8x128xf32>, vector<128x1408xf32>, vector<8x1408xf32> -> vector<8x1408xf32>
    %c0_4 = arith.constant 0 : index
    %c0_5 = arith.constant 0 : index
    %6 = vector.load %arg8[%c0_4, %c0_5] : memref<1x1408xf32, #tpu.memory_space<vmem>>, vector<1x1408xf32>
    %7 = vector.broadcast %6 : vector<1x1408xf32> to vector<8x1408xf32>
    %8 = arith.addf %5, %7 : vector<8x1408xf32>
    %c0_6 = arith.constant 0 : index
    %c0_7 = arith.constant 0 : index
    %9 = vector.load %arg9[%c0_6, %c0_7] : memref<8x1408xf32, #tpu.memory_space<vmem>>, vector<8x1408xf32>
    tpu.vector_store %arg9[%c0_6, %c0_7], %8 {strides = array<i32>} : memref<8x1408xf32, #tpu.memory_space<vmem>>, vector<8x1408xf32>,
    return
  }
  func.func @transform_0(%arg0: i32, %arg1: i32) -> (i32, i32) {
    %c0_i32 = arith.constant 0 : i32
    %c0_i32_0 = arith.constant 0 : i32
    return %arg0, %c0_i32 : i32, i32
  }
  func.func @transform_1(%arg0: i32, %arg1: i32) -> (i32, i32) {
    %c0_i32 = arith.constant 0 : i32
    %c0_i32_0 = arith.constant 0 : i32
    %c0_i32_1 = arith.constant 0 : i32
    return %c0_i32, %c0_i32_0 : i32, i32
  }
  func.func @transform_2(%arg0: i32, %arg1: i32) -> (i32, i32) {
    %c0_i32 = arith.constant 0 : i32
    %c0_i32_0 = arith.constant 0 : i32
    %c0_i32_1 = arith.constant 0 : i32
    return %c0_i32, %c0_i32_0 : i32, i32
  }
  func.func @transform_3(%arg0: i32, %arg1: i32) -> (i32, i32) {
    %c0_i32 = arith.constant 0 : i32
    %c0_i32_0 = arith.constant 0 : i32
    %c0_i32_1 = arith.constant 0 : i32
    return %c0_i32, %c0_i32_0 : i32, i32
  }
  func.func @transform_4(%arg0: i32, %arg1: i32) -> (i32, i32) {
    %c0_i32 = arith.constant 0 : i32
    %c0_i32_0 = arith.constant 0 : i32
    %c0_i32_1 = arith.constant 0 : i32
    return %c0_i32, %c0_i32_0 : i32, i32
  }
  func.func @transform_5(%arg0: i32, %arg1: i32) -> (i32, i32) {
    %c0_i32 = arith.constant 0 : i32
    %c0_i32_0 = arith.constant 0 : i32
    return %c0_i32, %arg1 : i32, i32
  }
  func.func @transform_6(%arg0: i32, %arg1: i32) -> (i32, i32) {
    %c0_i32 = arith.constant 0 : i32
    %c0_i32_0 = arith.constant 0 : i32
    return %c0_i32, %arg1 : i32, i32
  }
  func.func @transform_7(%arg0: i32, %arg1: i32) -> (i32, i32) {
    %c0_i32 = arith.constant 0 : i32
    return %arg0, %arg1 : i32, i32
  }
}

</mosaic_0001>

<llo_original>
// kernel: chess_qnetwork_naive_forward.1
$region0: #{chess_qnetwork_naive_forward.1}
  #allocation0 [shape = 'u32[]', space=smem, size = 0x4, offset = 0x4, fixed_abs, tag = 'smem constant byte address 0x4 - core index']
  #allocation1 [shape = 'u32[72,128]{1,0:T(1,128)}', space=vmem, size = 0x9000, scoped, tag = 'internal scratch']
  #allocation2 [shape = 'f32[8,128]{1,0:T(8,128)}', space=vmem, size = 0x1000, scoped, tag = 'scratch operand']
  %s0 = inlined_call_operand.vmem [shape: f32[8,4224], index: 0, kind: input, shape index: {}]
  %s1 = inlined_call_operand.hbm [shape: f32[4224,128], index: 1, kind: input, shape index: {}]
  %s2 = inlined_call_operand.hbm [shape: f32[1,128], index: 2, kind: input, shape index: {}]
  %s3 = inlined_call_operand.hbm [shape: f32[128,128], index: 3, kind: input, shape index: {}]
  %s4 = inlined_call_operand.hbm [shape: f32[1,128], index: 4, kind: input, shape index: {}]
  %s5 = inlined_call_operand.hbm [shape: f32[128,4224], index: 5, kind: input, shape index: {}]
  %s6 = inlined_call_operand.hbm [shape: f32[1,4224], index: 6, kind: input, shape index: {}]
  %s7 = inlined_call_operand.vmem [shape: f32[8,4224], index: 7, kind: output, shape index: {}]
  %s8 = sld [smem:[#allocation0]]
  $region89: #{chess_qnetwork_naive_forward.1} parent=0
    _
  %s10 = ssub.s32 1, %s8
  %s11 = scalar_select 0, %s10, %s8
  $region1: #{chess_qnetwork_naive_forward.1} parent=0
    #allocation3 [shape = 'u8[2162688]{0}', space=vmem, size = 0x210000, scoped, tag = 'input window, operand 1, single buffered']
    #allocation4 [shape = 's32[2]{0}', space=sflag, size = 0x8, scoped, tag = 'scoped memory for chess_qnetwork_naive_forward.1']
    #allocation5 [shape = 'u8[512]{0}', space=vmem, size = 0x400, scoped, tag = 'input window, operand 2, single buffered']
    #allocation6 [shape = 's32[1]{0}', space=sflag, size = 0x4, scoped, tag = 'scoped memory for chess_qnetwork_naive_forward.1']
    #allocation7 [shape = 'u8[65536]{0}', space=vmem, size = 0x10000, scoped, tag = 'input window, operand 3, single buffered']
    #allocation8 [shape = 'u8[512]{0}', space=vmem, size = 0x400, scoped, tag = 'input window, operand 4, single buffered']
    #allocation9 [shape = 's32[1]{0}', space=sflag, size = 0x4, scoped, tag = 'scoped memory for chess_qnetwork_naive_forward.1']
    #allocation10 [shape = 'u8[1441792]{0}', space=vmem, size = 0x160000, scoped, tag = 'input window, operand 5']
    #allocation11 [shape = 'u8[11264]{0}', space=vmem, size = 0x2c00, scoped, tag = 'input window, operand 6']
    %12 = vsyncpa [#allocation4], 0
    %13 = vsyncpa [#allocation6], 0
    %14 = vsyncpa [#allocation9], 0
    loop: start=0, step=1, limit=5
    $region2: #{chess_qnetwork_naive_forward.1} parent=1 // loop_pre_header
      _
    $region3: #{chess_qnetwork_naive_forward.1} parent=1 // loop_header
      %s16 = sphi 0, %s20
      %p17 = scmp.ge.s32.totalorder %s16, 5
      %s23 = sphi 0, %s35
      %s24 = sphi 0, %s31
      %s25 = sphi 0, %s23
      %s26 = sphi 0, %s24
      %s27 = sphi 0, %s25
      %s28 = sphi 0, %s26
      %s38 = sphi 0, %s40
      %s41 = sphi 0, %s38
      %s42 = sphi 0, %s41
      %s58 = sphi 0, %s42
      %s62 = sphi 0, %s62
      %s64 = sphi 0, %s62
      %s65 = sphi 0, %s64
      %s79 = sphi 0, %s65
      %s83 = sphi 0, %s83
      %s85 = sphi 0, %s83
      %s86 = sphi 0, %s85
      %s100 = sphi 0, %s86
      %s104 = sphi 0, %s104
      %s106 = sphi 0, %s104
      %s107 = sphi 0, %s106
      %s121 = sphi 0, %s107
      %s125 = sphi 0, %s125
      %s127 = sphi 0, %s125
      %s128 = sphi 0, %s127
      %s142 = sphi 0, %s128
      %s148 = sphi 0, %s150
      %s151 = sphi 0, %s148
      %s152 = sphi 0, %s151
      %s168 = sphi 0, %s152
      %s174 = sphi 0, %s176
      %s177 = sphi 0, %s174
      %s178 = sphi 0, %s177
      %s194 = sphi 0, %s178
      %s202 = sphi 0, %s204
      %s205 = sphi 0, %s202
      %s206 = sphi 0, %s205
      %s222 = sphi 0, %s206
    $region4: #{chess_qnetwork_naive_forward.1} parent=1 // loop_header_branch
      %19 = sbr.rel (%p17) target = $region8
    $region5: #{chess_qnetwork_naive_forward.1} parent=1 // loop_body
      %s21 = ssub.s32 %s16, 1
      %s22 = ssub.s32 %s16, 2
      %s29 = sadd.s32 1, %s24
      %p30 = scmp.ge.s32.totalorder %s29, 3
      %s31 = scalar_select %p30, 0, %s29
      %s32 = sadd.s32 1, %s23
      %s33 = scalar_select %p30, %s32, %s23
      %p34 = scmp.ge.s32.totalorder %s33, 1
      %s35 = scalar_select %p34, 0, %s33
      %s36 = ssub.s32 %s23, %s35
      %p37 = scmp.eq.s32.totalorder %s36, 0
      %s39 = sadd.s32 %s38, 1
      %s40 = scalar_select %p37, %s38, %s39
      %p43 = pneg %p37
      %p44 = scmp.eq.s32.totalorder %s16, 2
      %p45 = por %p43, %p44
      %p46 = scmp.ne.s32.totalorder %s38, %s41
      %p47 = scmp.eq.s32.totalorder %s16, 0
      %p48 = por %p46, %p47
      %p49 = scmp.ne.s32.totalorder %s38, %s41
      %p50 = scmp.eq.s32.totalorder %s21, 2
      %p51 = por %p49, %p50
      %p52 = scmp.ne.s32.totalorder %s41, %s42
      %p53 = scmp.eq.s32.totalorder %s21, 0
      %p54 = por %p52, %p53
      %p55 = scmp.ne.s32.totalorder %s41, %s42
      %p56 = scmp.eq.s32.totalorder %s22, 2
      %p57 = por %p55, %p56
      %p59 = scmp.ne.s32.totalorder %s42, %s58
      %p60 = scmp.eq.s32.totalorder %s22, 0
      %p61 = por %p59, %p60
      %s63 = sadd.s32 %s62, 1
      %p66 = scmp.eq.s32.totalorder %s16, 2
      %p67 = scmp.ne.s32.totalorder %s62, %s64
      %p68 = scmp.eq.s32.totalorder %s16, 0
      %p69 = por %p67, %p68
      %p70 = scmp.ne.s32.totalorder %s62, %s64
      %p71 = scmp.eq.s32.totalorder %s21, 2
      %p72 = por %p70, %p71
      %p73 = scmp.ne.s32.totalorder %s64, %s65
      %p74 = scmp.eq.s32.totalorder %s21, 0
      %p75 = por %p73, %p74
      %p76 = scmp.ne.s32.totalorder %s64, %s65
      %p77 = scmp.eq.s32.totalorder %s22, 2
      %p78 = por %p76, %p77
      %p80 = scmp.ne.s32.totalorder %s65, %s79
      %p81 = scmp.eq.s32.totalorder %s22, 0
      %p82 = por %p80, %p81
      %s84 = sadd.s32 %s83, 1
      %p87 = scmp.eq.s32.totalorder %s16, 2
      %p88 = scmp.ne.s32.totalorder %s83, %s85
      %p89 = scmp.eq.s32.totalorder %s16, 0
      %p90 = por %p88, %p89
      %p91 = scmp.ne.s32.totalorder %s83, %s85
      %p92 = scmp.eq.s32.totalorder %s21, 2
      %p93 = por %p91, %p92
      %p94 = scmp.ne.s32.totalorder %s85, %s86
      %p95 = scmp.eq.s32.totalorder %s21, 0
      %p96 = por %p94, %p95
      %p97 = scmp.ne.s32.totalorder %s85, %s86
      %p98 = scmp.eq.s32.totalorder %s22, 2
      %p99 = por %p97, %p98
      %p101 = scmp.ne.s32.totalorder %s86, %s100
      %p102 = scmp.eq.s32.totalorder %s22, 0
      %p103 = por %p101, %p102
      %s105 = sadd.s32 %s104, 1
      %p108 = scmp.eq.s32.totalorder %s16, 2
      %p109 = scmp.ne.s32.totalorder %s104, %s106
      %p110 = scmp.eq.s32.totalorder %s16, 0
      %p111 = por %p109, %p110
      %p112 = scmp.ne.s32.totalorder %s104, %s106
      %p113 = scmp.eq.s32.totalorder %s21, 2
      %p114 = por %p112, %p113
      %p115 = scmp.ne.s32.totalorder %s106, %s107
      %p116 = scmp.eq.s32.totalorder %s21, 0
      %p117 = por %p115, %p116
      %p118 = scmp.ne.s32.totalorder %s106, %s107
      %p119 = scmp.eq.s32.totalorder %s22, 2
      %p120 = por %p118, %p119
      %p122 = scmp.ne.s32.totalorder %s107, %s121
      %p123 = scmp.eq.s32.totalorder %s22, 0
      %p124 = por %p122, %p123
      %s126 = sadd.s32 %s125, 1
      %p129 = scmp.eq.s32.totalorder %s16, 2
      %p130 = scmp.ne.s32.totalorder %s125, %s127
      %p131 = scmp.eq.s32.totalorder %s16, 0
      %p132 = por %p130, %p131
      %p133 = scmp.ne.s32.totalorder %s125, %s127
      %p134 = scmp.eq.s32.totalorder %s21, 2
      %p135 = por %p133, %p134
      %p136 = scmp.ne.s32.totalorder %s127, %s128
      %p137 = scmp.eq.s32.totalorder %s21, 0
      %p138 = por %p136, %p137
      %p139 = scmp.ne.s32.totalorder %s127, %s128
      %p140 = scmp.eq.s32.totalorder %s22, 2
      %p141 = por %p139, %p140
      %p143 = scmp.ne.s32.totalorder %s128, %s142
      %p144 = scmp.eq.s32.totalorder %s22, 0
      %p145 = por %p143, %p144
      %s146 = ssub.s32 %s24, %s31
      %p147 = scmp.eq.s32.totalorder %s146, 0
      %s149 = sadd.s32 %s148, 1
      %s150 = scalar_select %p147, %s148, %s149
      %p153 = pneg %p147
      %p154 = scmp.eq.s32.totalorder %s16, 2
      %p155 = por %p153, %p154
      %p156 = scmp.ne.s32.totalorder %s148, %s151
      %p157 = scmp.eq.s32.totalorder %s16, 0
      %p158 = por %p156, %p157
      %p159 = scmp.ne.s32.totalorder %s148, %s151
      %p160 = scmp.eq.s32.totalorder %s21, 2
      %p161 = por %p159, %p160
      %p162 = scmp.ne.s32.totalorder %s151, %s152
      %p163 = scmp.eq.s32.totalorder %s21, 0
      %p164 = por %p162, %p163
      %p165 = scmp.ne.s32.totalorder %s151, %s152
      %p166 = scmp.eq.s32.totalorder %s22, 2
      %p167 = por %p165, %p166
      %p169 = scmp.ne.s32.totalorder %s152, %s168
      %p170 = scmp.eq.s32.totalorder %s22, 0
      %p171 = por %p169, %p170
      %s172 = ssub.s32 %s24, %s31
      %p173 = scmp.eq.s32.totalorder %s172, 0
      %s175 = sadd.s32 %s174, 1
      %s176 = scalar_select %p173, %s174, %s175
      %p179 = pneg %p173
      %p180 = scmp.eq.s32.totalorder %s16, 2
      %p181 = por %p179, %p180
      %p182 = scmp.ne.s32.totalorder %s174, %s177
      %p183 = scmp.eq.s32.totalorder %s16, 0
      %p184 = por %p182, %p183
      %p185 = scmp.ne.s32.totalorder %s174, %s177
      %p186 = scmp.eq.s32.totalorder %s21, 2
      %p187 = por %p185, %p186
      %p188 = scmp.ne.s32.totalorder %s177, %s178
      %p189 = scmp.eq.s32.totalorder %s21, 0
      %p190 = por %p188, %p189
      %p191 = scmp.ne.s32.totalorder %s177, %s178
      %p192 = scmp.eq.s32.totalorder %s22, 2
      %p193 = por %p191, %p192
      %p195 = scmp.ne.s32.totalorder %s178, %s194
      %p196 = scmp.eq.s32.totalorder %s22, 0
      %p197 = por %p195, %p196
      %s198 = ssub.s32 %s23, %s35
      %s199 = ssub.s32 %s24, %s31
      %s200 = sor.u32 %s198, %s199
      %p201 = scmp.eq.s32.totalorder %s200, 0
      %s203 = sadd.s32 %s202, 1
      %s204 = scalar_select %p201, %s202, %s203
      %p207 = pneg %p201
      %p208 = scmp.eq.s32.totalorder %s16, 2
      %p209 = por %p207, %p208
      %p210 = scmp.ne.s32.totalorder %s202, %s205
      %p211 = scmp.eq.s32.totalorder %s16, 0
      %p212 = por %p210, %p211
      %p213 = scmp.ne.s32.totalorder %s202, %s205
      %p214 = scmp.eq.s32.totalorder %s21, 2
      %p215 = por %p213, %p214
      %p216 = scmp.ne.s32.totalorder %s205, %s206
      %p217 = scmp.eq.s32.totalorder %s21, 0
      %p218 = por %p216, %p217
      %p219 = scmp.ne.s32.totalorder %s205, %s206
      %p220 = scmp.eq.s32.totalorder %s22, 2
      %p221 = por %p219, %p220
      %p223 = scmp.ne.s32.totalorder %s206, %s222
      %p224 = scmp.eq.s32.totalorder %s22, 0
      %p225 = por %p223, %p224
      %p226 = scmp.le.s32.totalorder 1, %s16
      %p227 = scmp.lt.s32.totalorder %s16, 4
      %p228 = pnand %p226, %p227
      %p229 = pneg %p228
      // Predicated region
      $region9: #{chess_qnetwork_naive_forward.1} parent=5 // pred_check
        _
      $region10: #{chess_qnetwork_naive_forward.1} parent=5 // pred_check_branch
        %231 = sbr.rel (%p228) target = $region12
      $region11: #{chess_qnetwork_naive_forward.1} parent=5 // pred_region
        %s232 = ssub.s32 %s16, 1
        // Predicated region
        $region13: #{chess_qnetwork_naive_forward.1} parent=11 // pred_check
          %p233 = pneg %p54
        $region14: #{chess_qnetwork_naive_forward.1} parent=11 // pred_check_branch
          %235 = sbr.rel (%p233) target = $region16
        $region15: #{chess_qnetwork_naive_forward.1} parent=11 // pred_region
          %p236 = scmp.lt.s32.totalorder %s25, 0
          %s237 = scalar_select %p236, %s25, 0
          %s238 = smul.addr %s237, 33
          %s239 = smul.addr %s238, 8
          %s240 = scalar_lea.vmem %s0, %s239
        $region16: #{chess_qnetwork_naive_forward.1} parent=11 // pred_fallthru
          _
        // Predicated region
        $region17: #{chess_qnetwork_naive_forward.1} parent=11 // pred_check
          %p241 = pneg %p75
        $region18: #{chess_qnetwork_naive_forward.1} parent=11 // pred_check_branch
          %243 = sbr.rel (%p241) target = $region20
        $region19: #{chess_qnetwork_naive_forward.1} parent=11 // pred_region
          %245 = vsyncadd [#allocation4], 0
          %s246 = sshll.u32 %s1, 4
          %s247 = int_to_ptr.hbm [resolvable:$true] %s246
          %s248 = sshll.u32 [#allocation3], 4
          %s249 = int_to_ptr.vmem [resolvable:$true] %s248
          %254 = dma.hbm_to_vmem [thread:$0]  %s247, 67584, %s249, [#allocation4], 128, 128, 8
        $region20: #{chess_qnetwork_naive_forward.1} parent=11 // pred_fallthru
          _
        // Predicated region
        $region21: #{chess_qnetwork_naive_forward.1} parent=11 // pred_check
          %p255 = pneg %p96
        $region22: #{chess_qnetwork_naive_forward.1} parent=11 // pred_check_branch
          %257 = sbr.rel (%p255) target = $region24
        $region23: #{chess_qnetwork_naive_forward.1} parent=11 // pred_region
          %259 = vsyncadd [#allocation6], 0
          %s261 = sshll.u32 %s2, 4
          %s262 = int_to_ptr.hbm [resolvable:$true] %s261
          %s263 = sshll.u32 [#allocation5], 4
          %s264 = int_to_ptr.vmem [resolvable:$true] %s263
          %266 = dma.hbm_to_vmem [thread:$0]  %s262, 16, %s264, [#allocation6]
        $region24: #{chess_qnetwork_naive_forward.1} parent=11 // pred_fallthru
          _
        // Predicated region
        $region25: #{chess_qnetwork_naive_forward.1} parent=11 // pred_check
          %p267 = pneg %p117
        $region26: #{chess_qnetwork_naive_forward.1} parent=11 // pred_check_branch
          %269 = sbr.rel (%p267) target = $region28
        $region27: #{chess_qnetwork_naive_forward.1} parent=11 // pred_region
          %271 = vsyncadd [#allocation6], 0
          %s272 = sshll.u32 %s3, 4
          %s273 = int_to_ptr.hbm [resolvable:$true] %s272
          %s274 = sshll.u32 [#allocation7], 4
          %s275 = int_to_ptr.vmem [resolvable:$true] %s274
          %280 = dma.hbm_to_vmem [thread:$0]  %s273, 2048, %s275, [#allocation6], 128, 128, 8
        $region28: #{chess_qnetwork_naive_forward.1} parent=11 // pred_fallthru
          _
        // Predicated region
        $region29: #{chess_qnetwork_naive_forward.1} parent=11 // pred_check
          %p281 = pneg %p138
        $region30: #{chess_qnetwork_naive_forward.1} parent=11 // pred_check_branch
          %283 = sbr.rel (%p281) target = $region32
        $region31: #{chess_qnetwork_naive_forward.1} parent=11 // pred_region
          %285 = vsyncadd [#allocation9], 0
          %s287 = sshll.u32 %s4, 4
          %s288 = int_to_ptr.hbm [resolvable:$true] %s287
          %s289 = sshll.u32 [#allocation8], 4
          %s290 = int_to_ptr.vmem [resolvable:$true] %s289
          %292 = dma.hbm_to_vmem [thread:$0]  %s288, 16, %s290, [#allocation9]
        $region32: #{chess_qnetwork_naive_forward.1} parent=11 // pred_fallthru
          _
      $region12: #{chess_qnetwork_naive_forward.1} parent=5 // pred_fallthru
        _
      %p293 = scmp.lt.s32.totalorder %s16, 3
      // Predicated region
      $region33: #{chess_qnetwork_naive_forward.1} parent=5 // pred_check
        %p294 = pneg %p293
      $region34: #{chess_qnetwork_naive_forward.1} parent=5 // pred_check_branch
        %296 = sbr.rel (%p294) target = $region36
      $region35: #{chess_qnetwork_naive_forward.1} parent=5 // pred_region
        // Predicated region
        $region37: #{chess_qnetwork_naive_forward.1} parent=35 // pred_check
          %p297 = pneg %p158
        $region38: #{chess_qnetwork_naive_forward.1} parent=35 // pred_check_branch
          %299 = sbr.rel (%p297) target = $region40
        $region39: #{chess_qnetwork_naive_forward.1} parent=35 // pred_region
          %s300 = sand.u32 %s16, 1
          %s301 = scalar_lea.sflag [#allocation4], %s300
          %s302 = sand.u32 %s148, 1
          %s303 = smul.addr %s302, 1408
          %s304 = scalar_lea.vmem [#allocation10], %s303
          %s305 = smul.u32 11, %s24
          %307 = vsyncadd %s301, 0
          %s308 = smul.addr %s305, 8
          %s309 = scalar_lea.hbm %s5, %s308
          %s310 = sshll.u32 %s309, 4
          %s311 = int_to_ptr.hbm [resolvable:$true] %s310
          %s312 = sshll.u32 %s304, 4
          %s313 = int_to_ptr.vmem [resolvable:$true] %s312
          %318 = dma.hbm_to_vmem [thread:$0]  %s311, 22528, %s313, %s301, 4224, 1408, 88
        $region40: #{chess_qnetwork_naive_forward.1} parent=35 // pred_fallthru
          _
        // Predicated region
        $region41: #{chess_qnetwork_naive_forward.1} parent=35 // pred_check
          %p319 = pneg %p184
        $region42: #{chess_qnetwork_naive_forward.1} parent=35 // pred_check_branch
          %321 = sbr.rel (%p319) target = $region44
        $region43: #{chess_qnetwork_naive_forward.1} parent=35 // pred_region
          %s322 = sand.u32 %s16, 1
          %s323 = scalar_lea.sflag [#allocation4], %s322
          %s324 = sand.u32 %s174, 1
          %s325 = smul.addr %s324, 11
          %s326 = scalar_lea.vmem [#allocation11], %s325
          %s327 = smul.u32 11, %s24
          %329 = vsyncadd %s323, 0
          %s330 = scalar_lea.hbm %s6, %s327
          %s332 = sshll.u32 %s330, 4
          %s333 = int_to_ptr.hbm [resolvable:$true] %s332
          %s334 = sshll.u32 %s326, 4
          %s335 = int_to_ptr.vmem [resolvable:$true] %s334
          %337 = dma.hbm_to_vmem [thread:$0]  %s333, 176, %s335, %s323
        $region44: #{chess_qnetwork_naive_forward.1} parent=35 // pred_fallthru
          _
      $region36: #{chess_qnetwork_naive_forward.1} parent=5 // pred_fallthru
        _
      %p338 = scmp.le.s32.totalorder 1, %s16
      %p339 = scmp.lt.s32.totalorder %s16, 4
      %p340 = pnand %p338, %p339
      %p341 = pneg %p340
      // Predicated region
      $region45: #{chess_qnetwork_naive_forward.1} parent=5 // pred_check
        _
      $region46: #{chess_qnetwork_naive_forward.1} parent=5 // pred_check_branch
        %343 = sbr.rel (%p340) target = $region48
      $region47: #{chess_qnetwork_naive_forward.1} parent=5 // pred_region
        %s344 = ssub.s32 %s16, 1
        // Predicated region
        $region49: #{chess_qnetwork_naive_forward.1} parent=47 // pred_check
          %p345 = pneg %p75
        $region50: #{chess_qnetwork_naive_forward.1} parent=47 // pred_check_branch
          %347 = sbr.rel (%p345) target = $region52
        $region51: #{chess_qnetwork_naive_forward.1} parent=47 // pred_region
          %349 = dma.done [#allocation4], 67584
        $region52: #{chess_qnetwork_naive_forward.1} parent=47 // pred_fallthru
          _
        // Predicated region
        $region53: #{chess_qnetwork_naive_forward.1} parent=47 // pred_check
          %p350 = pneg %p96
        $region54: #{chess_qnetwork_naive_forward.1} parent=47 // pred_check_branch
          %352 = sbr.rel (%p350) target = $region56
        $region55: #{chess_qnetwork_naive_forward.1} parent=47 // pred_region
          %354 = dma.done [#allocation6], 16
        $region56: #{chess_qnetwork_naive_forward.1} parent=47 // pred_fallthru
          _
        // Predicated region
        $region57: #{chess_qnetwork_naive_forward.1} parent=47 // pred_check
          %p355 = pneg %p117
        $region58: #{chess_qnetwork_naive_forward.1} parent=47 // pred_check_branch
          %357 = sbr.rel (%p355) target = $region60
        $region59: #{chess_qnetwork_naive_forward.1} parent=47 // pred_region
          %359 = dma.done [#allocation6], 2048
        $region60: #{chess_qnetwork_naive_forward.1} parent=47 // pred_fallthru
          _
        // Predicated region
        $region61: #{chess_qnetwork_naive_forward.1} parent=47 // pred_check
          %p360 = pneg %p138
        $region62: #{chess_qnetwork_naive_forward.1} parent=47 // pred_check_branch
          %362 = sbr.rel (%p360) target = $region64
        $region63: #{chess_qnetwork_naive_forward.1} parent=47 // pred_region
          %364 = dma.done [#allocation9], 16
        $region64: #{chess_qnetwork_naive_forward.1} parent=47 // pred_fallthru
          _
        %s365 = sand.u32 %s21, 1
        %s366 = scalar_lea.sflag [#allocation4], %s365
        %s367 = sand.u32 %s151, 1
        %s368 = smul.addr %s367, 1408
        %s369 = scalar_lea.vmem [#allocation10], %s368
        // Predicated region
        $region65: #{chess_qnetwork_naive_forward.1} parent=47 // pred_check
          %p370 = pneg %p164
        $region66: #{chess_qnetwork_naive_forward.1} parent=47 // pred_check_branch
          %372 = sbr.rel (%p370) target = $region68
        $region67: #{chess_qnetwork_naive_forward.1} parent=47 // pred_region
          %374 = dma.done %s366, 22528
        $region68: #{chess_qnetwork_naive_forward.1} parent=47 // pred_fallthru
          _
        %s375 = sand.u32 %s21, 1
        %s376 = scalar_lea.sflag [#allocation4], %s375
        %s377 = sand.u32 %s177, 1
        %s378 = smul.addr %s377, 11
        %s379 = scalar_lea.vmem [#allocation11], %s378
        // Predicated region
        $region69: #{chess_qnetwork_naive_forward.1} parent=47 // pred_check
          %p380 = pneg %p190
        $region70: #{chess_qnetwork_naive_forward.1} parent=47 // pred_check_branch
          %382 = sbr.rel (%p380) target = $region72
        $region71: #{chess_qnetwork_naive_forward.1} parent=47 // pred_region
          %384 = dma.done %s376, 176
        $region72: #{chess_qnetwork_naive_forward.1} parent=47 // pred_fallthru
          _
        %p385 = scmp.lt.s32.totalorder %s25, 0
        %s386 = scalar_select %p385, %s25, 0
        %s387 = smul.addr %s386, 33
        %s388 = smul.addr %s387, 8
        %s389 = scalar_lea.vmem %s0, %s388
        %p390 = pneg %p54
        %p391 = pneg %p51
        %p392 = pneg %p75
        %p393 = pneg %p72
        %p394 = pneg %p96
        %p395 = pneg %p93
        %p396 = pneg %p117
        %p397 = pneg %p114
        %p398 = pneg %p138
        %p399 = pneg %p135
        %s400 = sand.u32 %s21, 1
        %s401 = scalar_lea.sflag [#allocation4], %s400
        %s402 = sand.u32 %s151, 1
        %s403 = smul.addr %s402, 1408
        %s404 = scalar_lea.vmem [#allocation10], %s403
        %p405 = pneg %p164
        %p406 = pneg %p161
        %s407 = sand.u32 %s21, 1
        %s408 = scalar_lea.sflag [#allocation4], %s407
        %s409 = sand.u32 %s177, 1
        %s410 = smul.addr %s409, 11
        %s411 = scalar_lea.vmem [#allocation11], %s410
        %p412 = pneg %p190
        %p413 = pneg %p187
        %p414 = pneg %p218
        %p415 = pneg %p215
        %s416 = smul.u32 11, %s26
        %p417 = scmp.lt.s32.totalorder %s25, 0
        %s418 = scalar_select %p417, %s25, 0
        %p419 = scmp.lt.s32.totalorder %s416, 32
        %s420 = scalar_select %p419, %s416, 32
        %s421 = smul.addr %s418, 33
        %s422 = sadd.s32 %s420, %s421
        %s423 = smul.addr %s422, 8
        %s424 = scalar_lea.vmem %s7, %s423
        %p425 = scmp.lt.s32.totalorder %s25, 0
        %s426 = scalar_select %p425, %s25, 0
        %s427 = smul.addr %s426, 33
        %s428 = smul.addr %s427, 8
        %s429 = scalar_lea.vmem %s0, %s428
        %s430 = smul.u32 11, %s26
        %s431 = smul.u32 11, %s26
        %s432 = smul.u32 11, %s26
        %p433 = scmp.lt.s32.totalorder %s25, 0
        %s434 = scalar_select %p433, %s25, 0
        %p435 = scmp.lt.s32.totalorder %s432, 32
        %s436 = scalar_select %p435, %s432, 32
        %s437 = smul.addr %s434, 33
        %s438 = sadd.s32 %s436, %s437
        %s439 = smul.addr %s438, 8
        %s440 = scalar_lea.vmem %s7, %s439
        %s441 = smul.u32 11, %s26
        %p442 = scmp.eq.s32.totalorder %s26, 0
        // Predicated region
        $region73: #{chess_qnetwork_naive_forward.1} parent=47 // pred_check
          %p443 = pneg %p442
        $region74: #{chess_qnetwork_naive_forward.1} parent=47 // pred_check_branch
          %445 = sbr.rel (%p443) target = $region76
        $region75: #{chess_qnetwork_naive_forward.1} parent=47 // pred_region
          %v446 = vld [vmem:[%s429] sm:$0xff]
          %v447 = vld [vmem:[%s429 + $0x8] sm:$0xff]
          %v448 = vld [vmem:[%s429 + $0x10] sm:$0xff]
          %v449 = vld [vmem:[%s429 + $0x18] sm:$0xff]
          %v450 = vld [vmem:[%s429 + $0x20] sm:$0xff]
          %v451 = vld [vmem:[%s429 + $0x28] sm:$0xff]
          %v452 = vld [vmem:[%s429 + $0x30] sm:$0xff]
          %v453 = vld [vmem:[%s429 + $0x38] sm:$0xff]
          %v454 = vld [vmem:[%s429 + $0x40] sm:$0xff]
          %v455 = vld [vmem:[%s429 + $0x48] sm:$0xff]
          %v456 = vld [vmem:[%s429 + $0x50] sm:$0xff]
          %v457 = vld [vmem:[%s429 + $0x58] sm:$0xff]
          %v458 = vld [vmem:[%s429 + $0x60] sm:$0xff]
          %v459 = vld [vmem:[%s429 + $0x68] sm:$0xff]
          %v460 = vld [vmem:[%s429 + $0x70] sm:$0xff]
          %v461 = vld [vmem:[%s429 + $0x78] sm:$0xff]
          %v462 = vld [vmem:[%s429 + $0x80] sm:$0xff]
          %v463 = vld [vmem:[%s429 + $0x88] sm:$0xff]
          %v464 = vld [vmem:[%s429 + $0x90] sm:$0xff]
          %v465 = vld [vmem:[%s429 + $0x98] sm:$0xff]
          %v466 = vld [vmem:[%s429 + $0xa0] sm:$0xff]
          %v467 = vld [vmem:[%s429 + $0xa8] sm:$0xff]
          %v468 = vld [vmem:[%s429 + $0xb0] sm:$0xff]
          %v469 = vld [vmem:[%s429 + $0xb8] sm:$0xff]
          %v470 = vld [vmem:[%s429 + $0xc0] sm:$0xff]
          %v471 = vld [vmem:[%s429 + $0xc8] sm:$0xff]
          %v472 = vld [vmem:[%s429 + $0xd0] sm:$0xff]
          %v473 = vld [vmem:[%s429 + $0xd8] sm:$0xff]
          %v474 = vld [vmem:[%s429 + $0xe0] sm:$0xff]
          %v475 = vld [vmem:[%s429 + $0xe8] sm:$0xff]
          %v476 = vld [vmem:[%s429 + $0xf0] sm:$0xff]
          %v477 = vld [vmem:[%s429 + $0xf8] sm:$0xff]
          %v478 = vld [vmem:[%s429 + $0x100] sm:$0xff]
          %v479 = vld [vmem:[#allocation3] sm:$0xff]
          %v480 = vld [vmem:[#allocation3 + $0x8] sm:$0xff]
          %v481 = vld [vmem:[#allocation3 + $0x10] sm:$0xff]
          %v482 = vld [vmem:[#allocation3 + $0x18] sm:$0xff]
          %v483 = vld [vmem:[#allocation3 + $0x20] sm:$0xff]
          %v484 = vld [vmem:[#allocation3 + $0x28] sm:$0xff]
          %v485 = vld [vmem:[#allocation3 + $0x30] sm:$0xff]
          %v486 = vld [vmem:[#allocation3 + $0x38] sm:$0xff]
          %v487 = vld [vmem:[#allocation3 + $0x40] sm:$0xff]
          %v488 = vld [vmem:[#allocation3 + $0x48] sm:$0xff]
          %v489 = vld [vmem:[#allocation3 + $0x50] sm:$0xff]
          %v490 = vld [vmem:[#allocation3 + $0x58] sm:$0xff]
          %v491 = vld [vmem:[#allocation3 + $0x60] sm:$0xff]
          %v492 = vld [vmem:[#allocation3 + $0x68] sm:$0xff]
          %v493 = vld [vmem:[#allocation3 + $0x70] sm:$0xff]
          %v494 = vld [vmem:[#allocation3 + $0x78] sm:$0xff]
          %v495 = vld [vmem:[#allocation3 + $0x80] sm:$0xff]
          %v496 = vld [vmem:[#allocation3 + $0x88] sm:$0xff]
          %v497 = vld [vmem:[#allocation3 + $0x90] sm:$0xff]
          %v498 = vld [vmem:[#allocation3 + $0x98] sm:$0xff]
          %v499 = vld [vmem:[#allocation3 + $0xa0] sm:$0xff]
          %v500 = vld [vmem:[#allocation3 + $0xa8] sm:$0xff]
          %v501 = vld [vmem:[#allocation3 + $0xb0] sm:$0xff]
          %v502 = vld [vmem:[#allocation3 + $0xb8] sm:$0xff]
          %v503 = vld [vmem:[#allocation3 + $0xc0] sm:$0xff]
          %v504 = vld [vmem:[#allocation3 + $0xc8] sm:$0xff]
          %v505 = vld [vmem:[#allocation3 + $0xd0] sm:$0xff]
          %v506 = vld [vmem:[#allocation3 + $0xd8] sm:$0xff]
          %v507 = vld [vmem:[#allocation3 + $0xe0] sm:$0xff]
          %v508 = vld [vmem:[#allocation3 + $0xe8] sm:$0xff]
          %v509 = vld [vmem:[#allocation3 + $0xf0] sm:$0xff]
          %v510 = vld [vmem:[#allocation3 + $0xf8] sm:$0xff]
          %v511 = vld [vmem:[#allocation3 + $0x100] sm:$0xff]
          %v512 = vld [vmem:[#allocation3 + $0x108] sm:$0xff]
          %v513 = vld [vmem:[#allocation3 + $0x110] sm:$0xff]
          %v514 = vld [vmem:[#allocation3 + $0x118] sm:$0xff]
          %v515 = vld [vmem:[#allocation3 + $0x120] sm:$0xff]
          %v516 = vld [vmem:[#allocation3 + $0x128] sm:$0xff]
          %v517 = vld [vmem:[#allocation3 + $0x130] sm:$0xff]
          %v518 = vld [vmem:[#allocation3 + $0x138] sm:$0xff]
          %v519 = vld [vmem:[#allocation3 + $0x140] sm:$0xff]
          %v520 = vld [vmem:[#allocation3 + $0x148] sm:$0xff]
          %v521 = vld [vmem:[#allocation3 + $0x150] sm:$0xff]
          %v522 = vld [vmem:[#allocation3 + $0x158] sm:$0xff]
          %v523 = vld [vmem:[#allocation3 + $0x160] sm:$0xff]
          %v524 = vld [vmem:[#allocation3 + $0x168] sm:$0xff]
          %v525 = vld [vmem:[#allocation3 + $0x170] sm:$0xff]
          %v526 = vld [vmem:[#allocation3 + $0x178] sm:$0xff]
          %v527 = vld [vmem:[#allocation3 + $0x180] sm:$0xff]
          %v528 = vld [vmem:[#allocation3 + $0x188] sm:$0xff]
          %v529 = vld [vmem:[#allocation3 + $0x190] sm:$0xff]
          %v530 = vld [vmem:[#allocation3 + $0x198] sm:$0xff]
          %v531 = vld [vmem:[#allocation3 + $0x1a0] sm:$0xff]
          %v532 = vld [vmem:[#allocation3 + $0x1a8] sm:$0xff]
          %v533 = vld [vmem:[#allocation3 + $0x1b0] sm:$0xff]
          %v534 = vld [vmem:[#allocation3 + $0x1b8] sm:$0xff]
          %v535 = vld [vmem:[#allocation3 + $0x1c0] sm:$0xff]
          %v536 = vld [vmem:[#allocation3 + $0x1c8] sm:$0xff]
          %v537 = vld [vmem:[#allocation3 + $0x1d0] sm:$0xff]
          %v538 = vld [vmem:[#allocation3 + $0x1d8] sm:$0xff]
          %v539 = vld [vmem:[#allocation3 + $0x1e0] sm:$0xff]
          %v540 = vld [vmem:[#allocation3 + $0x1e8] sm:$0xff]
          %v541 = vld [vmem:[#allocation3 + $0x1f0] sm:$0xff]
          %v542 = vld [vmem:[#allocation3 + $0x1f8] sm:$0xff]
          %v543 = vld [vmem:[#allocation3 + $0x200] sm:$0xff]
          %v544 = vld [vmem:[#allocation3 + $0x208] sm:$0xff]
          %v545 = vld [vmem:[#allocation3 + $0x210] sm:$0xff]
          %v546 = vld [vmem:[#allocation3 + $0x218] sm:$0xff]
          %v547 = vld [vmem:[#allocation3 + $0x220] sm:$0xff]
          %v548 = vld [vmem:[#allocation3 + $0x228] sm:$0xff]
          %v549 = vld [vmem:[#allocation3 + $0x230] sm:$0xff]
          %v550 = vld [vmem:[#allocation3 + $0x238] sm:$0xff]
          %v551 = vld [vmem:[#allocation3 + $0x240] sm:$0xff]
          %v552 = vld [vmem:[#allocation3 + $0x248] sm:$0xff]
          %v553 = vld [vmem:[#allocation3 + $0x250] sm:$0xff]
          %v554 = vld [vmem:[#allocation3 + $0x258] sm:$0xff]
          %v555 = vld [vmem:[#allocation3 + $0x260] sm:$0xff]
          %v556 = vld [vmem:[#allocation3 + $0x268] sm:$0xff]
          %v557 = vld [vmem:[#allocation3 + $0x270] sm:$0xff]
          %v558 = vld [vmem:[#allocation3 + $0x278] sm:$0xff]
          %v559 = vld [vmem:[#allocation3 + $0x280] sm:$0xff]
          %v560 = vld [vmem:[#allocation3 + $0x288] sm:$0xff]
          %v561 = vld [vmem:[#allocation3 + $0x290] sm:$0xff]
          %v562 = vld [vmem:[#allocation3 + $0x298] sm:$0xff]
          %v563 = vld [vmem:[#allocation3 + $0x2a0] sm:$0xff]
          %v564 = vld [vmem:[#allocation3 + $0x2a8] sm:$0xff]
          %v565 = vld [vmem:[#allocation3 + $0x2b0] sm:$0xff]
          %v566 = vld [vmem:[#allocation3 + $0x2b8] sm:$0xff]
          %v567 = vld [vmem:[#allocation3 + $0x2c0] sm:$0xff]
          %v568 = vld [vmem:[#allocation3 + $0x2c8] sm:$0xff]
          %v569 = vld [vmem:[#allocation3 + $0x2d0] sm:$0xff]
          %v570 = vld [vmem:[#allocation3 + $0x2d8] sm:$0xff]
          %v571 = vld [vmem:[#allocation3 + $0x2e0] sm:$0xff]
          %v572 = vld [vmem:[#allocation3 + $0x2e8] sm:$0xff]
          %v573 = vld [vmem:[#allocation3 + $0x2f0] sm:$0xff]
          %v574 = vld [vmem:[#allocation3 + $0x2f8] sm:$0xff]
          %v575 = vld [vmem:[#allocation3 + $0x300] sm:$0xff]
          %v576 = vld [vmem:[#allocation3 + $0x308] sm:$0xff]
          %v577 = vld [vmem:[#allocation3 + $0x310] sm:$0xff]
          %v578 = vld [vmem:[#allocation3 + $0x318] sm:$0xff]
          %v579 = vld [vmem:[#allocation3 + $0x320] sm:$0xff]
          %v580 = vld [vmem:[#allocation3 + $0x328] sm:$0xff]
          %v581 = vld [vmem:[#allocation3 + $0x330] sm:$0xff]
          %v582 = vld [vmem:[#allocation3 + $0x338] sm:$0xff]
          %v583 = vld [vmem:[#allocation3 + $0x340] sm:$0xff]
          %v584 = vld [vmem:[#allocation3 + $0x348] sm:$0xff]
          %v585 = vld [vmem:[#allocation3 + $0x350] sm:$0xff]
          %v586 = vld [vmem:[#allocation3 + $0x358] sm:$0xff]
          %v587 = vld [vmem:[#allocation3 + $0x360] sm:$0xff]
          %v588 = vld [vmem:[#allocation3 + $0x368] sm:$0xff]
          %v589 = vld [vmem:[#allocation3 + $0x370] sm:$0xff]
          %v590 = vld [vmem:[#allocation3 + $0x378] sm:$0xff]
          %v591 = vld [vmem:[#allocation3 + $0x380] sm:$0xff]
          %v592 = vld [vmem:[#allocation3 + $0x388] sm:$0xff]
          %v593 = vld [vmem:[#allocation3 + $0x390] sm:$0xff]
          %v594 = vld [vmem:[#allocation3 + $0x398] sm:$0xff]
          %v595 = vld [vmem:[#allocation3 + $0x3a0] sm:$0xff]
          %v596 = vld [vmem:[#allocation3 + $0x3a8] sm:$0xff]
          %v597 = vld [vmem:[#allocation3 + $0x3b0] sm:$0xff]
          %v598 = vld [vmem:[#allocation3 + $0x3b8] sm:$0xff]
          %v599 = vld [vmem:[#allocation3 + $0x3c0] sm:$0xff]
          %v600 = vld [vmem:[#allocation3 + $0x3c8] sm:$0xff]
          %v601 = vld [vmem:[#allocation3 + $0x3d0] sm:$0xff]
          %v602 = vld [vmem:[#allocation3 + $0x3d8] sm:$0xff]
          %v603 = vld [vmem:[#allocation3 + $0x3e0] sm:$0xff]
          %v604 = vld [vmem:[#allocation3 + $0x3e8] sm:$0xff]
          %v605 = vld [vmem:[#allocation3 + $0x3f0] sm:$0xff]
          %v606 = vld [vmem:[#allocation3 + $0x3f8] sm:$0xff]
          %v607 = vld [vmem:[#allocation3 + $0x400] sm:$0xff]
          %v608 = vld [vmem:[#allocation3 + $0x408] sm:$0xff]
          %v609 = vld [vmem:[#allocation3 + $0x410] sm:$0xff]
          %v610 = vld [vmem:[#allocation3 + $0x418] sm:$0xff]
          %v611 = vld [vmem:[#allocation3 + $0x420] sm:$0xff]
          %v612 = vld [vmem:[#allocation3 + $0x428] sm:$0xff]
          %v613 = vld [vmem:[#allocation3 + $0x430] sm:$0xff]
          %v614 = vld [vmem:[#allocation3 + $0x438] sm:$0xff]
          %v615 = vld [vmem:[#allocation3 + $0x440] sm:$0xff]
          %v616 = vld [vmem:[#allocation3 + $0x448] sm:$0xff]
          %v617 = vld [vmem:[#allocation3 + $0x450] sm:$0xff]
          %v618 = vld [vmem:[#allocation3 + $0x458] sm:$0xff]
          %v619 = vld [vmem:[#allocation3 + $0x460] sm:$0xff]
          %v620 = vld [vmem:[#allocation3 + $0x468] sm:$0xff]
          %v621 = vld [vmem:[#allocation3 + $0x470] sm:$0xff]
          %v622 = vld [vmem:[#allocation3 + $0x478] sm:$0xff]
          %v623 = vld [vmem:[#allocation3 + $0x480] sm:$0xff]
          %v624 = vld [vmem:[#allocation3 + $0x488] sm:$0xff]
          %v625 = vld [vmem:[#allocation3 + $0x490] sm:$0xff]
          %v626 = vld [vmem:[#allocation3 + $0x498] sm:$0xff]
          %v627 = vld [vmem:[#allocation3 + $0x4a0] sm:$0xff]
          %v628 = vld [vmem:[#allocation3 + $0x4a8] sm:$0xff]
          %v629 = vld [vmem:[#allocation3 + $0x4b0] sm:$0xff]
          %v630 = vld [vmem:[#allocation3 + $0x4b8] sm:$0xff]
          %v631 = vld [vmem:[#allocation3 + $0x4c0] sm:$0xff]
          %v632 = vld [vmem:[#allocation3 + $0x4c8] sm:$0xff]
          %v633 = vld [vmem:[#allocation3 + $0x4d0] sm:$0xff]
          %v634 = vld [vmem:[#allocation3 + $0x4d8] sm:$0xff]
          %v635 = vld [vmem:[#allocation3 + $0x4e0] sm:$0xff]
          %v636 = vld [vmem:[#allocation3 + $0x4e8] sm:$0xff]
          %v637 = vld [vmem:[#allocation3 + $0x4f0] sm:$0xff]
          %v638 = vld [vmem:[#allocation3 + $0x4f8] sm:$0xff]
          %v639 = vld [vmem:[#allocation3 + $0x500] sm:$0xff]
          %v640 = vld [vmem:[#allocation3 + $0x508] sm:$0xff]
          %v641 = vld [vmem:[#allocation3 + $0x510] sm:$0xff]
          %v642 = vld [vmem:[#allocation3 + $0x518] sm:$0xff]
          %v643 = vld [vmem:[#allocation3 + $0x520] sm:$0xff]
          %v644 = vld [vmem:[#allocation3 + $0x528] sm:$0xff]
          %v645 = vld [vmem:[#allocation3 + $0x530] sm:$0xff]
          %v646 = vld [vmem:[#allocation3 + $0x538] sm:$0xff]
          %v647 = vld [vmem:[#allocation3 + $0x540] sm:$0xff]
          %v648 = vld [vmem:[#allocation3 + $0x548] sm:$0xff]
          %v649 = vld [vmem:[#allocation3 + $0x550] sm:$0xff]
          %v650 = vld [vmem:[#allocation3 + $0x558] sm:$0xff]
          %v651 = vld [vmem:[#allocation3 + $0x560] sm:$0xff]
          %v652 = vld [vmem:[#allocation3 + $0x568] sm:$0xff]
          %v653 = vld [vmem:[#allocation3 + $0x570] sm:$0xff]
          %v654 = vld [vmem:[#allocation3 + $0x578] sm:$0xff]
          %v655 = vld [vmem:[#allocation3 + $0x580] sm:$0xff]
          %v656 = vld [vmem:[#allocation3 + $0x588] sm:$0xff]
          %v657 = vld [vmem:[#allocation3 + $0x590] sm:$0xff]
          %v658 = vld [vmem:[#allocation3 + $0x598] sm:$0xff]
          %v659 = vld [vmem:[#allocation3 + $0x5a0] sm:$0xff]
          %v660 = vld [vmem:[#allocation3 + $0x5a8] sm:$0xff]
          %v661 = vld [vmem:[#allocation3 + $0x5b0] sm:$0xff]
          %v662 = vld [vmem:[#allocation3 + $0x5b8] sm:$0xff]
          %v663 = vld [vmem:[#allocation3 + $0x5c0] sm:$0xff]
          %v664 = vld [vmem:[#allocation3 + $0x5c8] sm:$0xff]
          %v665 = vld [vmem:[#allocation3 + $0x5d0] sm:$0xff]
          %v666 = vld [vmem:[#allocation3 + $0x5d8] sm:$0xff]
          %v667 = vld [vmem:[#allocation3 + $0x5e0] sm:$0xff]
          %v668 = vld [vmem:[#allocation3 + $0x5e8] sm:$0xff]
          %v669 = vld [vmem:[#allocation3 + $0x5f0] sm:$0xff]
          %v670 = vld [vmem:[#allocation3 + $0x5f8] sm:$0xff]
          %v671 = vld [vmem:[#allocation3 + $0x600] sm:$0xff]
          %v672 = vld [vmem:[#allocation3 + $0x608] sm:$0xff]
          %v673 = vld [vmem:[#allocation3 + $0x610] sm:$0xff]
          %v674 = vld [vmem:[#allocation3 + $0x618] sm:$0xff]
          %v675 = vld [vmem:[#allocation3 + $0x620] sm:$0xff]
          %v676 = vld [vmem:[#allocation3 + $0x628] sm:$0xff]
          %v677 = vld [vmem:[#allocation3 + $0x630] sm:$0xff]
          %v678 = vld [vmem:[#allocation3 + $0x638] sm:$0xff]
          %v679 = vld [vmem:[#allocation3 + $0x640] sm:$0xff]
          %v680 = vld [vmem:[#allocation3 + $0x648] sm:$0xff]
          %v681 = vld [vmem:[#allocation3 + $0x650] sm:$0xff]
          %v682 = vld [vmem:[#allocation3 + $0x658] sm:$0xff]
          %v683 = vld [vmem:[#allocation3 + $0x660] sm:$0xff]
          %v684 = vld [vmem:[#allocation3 + $0x668] sm:$0xff]
          %v685 = vld [vmem:[#allocation3 + $0x670] sm:$0xff]
          %v686 = vld [vmem:[#allocation3 + $0x678] sm:$0xff]
          %v687 = vld [vmem:[#allocation3 + $0x680] sm:$0xff]
          %v688 = vld [vmem:[#allocation3 + $0x688] sm:$0xff]
          %v689 = vld [vmem:[#allocation3 + $0x690] sm:$0xff]
          %v690 = vld [vmem:[#allocation3 + $0x698] sm:$0xff]
          %v691 = vld [vmem:[#allocation3 + $0x6a0] sm:$0xff]
          %v692 = vld [vmem:[#allocation3 + $0x6a8] sm:$0xff]
          %v693 = vld [vmem:[#allocation3 + $0x6b0] sm:$0xff]
          %v694 = vld [vmem:[#allocation3 + $0x6b8] sm:$0xff]
          %v695 = vld [vmem:[#allocation3 + $0x6c0] sm:$0xff]
          %v696 = vld [vmem:[#allocation3 + $0x6c8] sm:$0xff]
          %v697 = vld [vmem:[#allocation3 + $0x6d0] sm:$0xff]
          %v698 = vld [vmem:[#allocation3 + $0x6d8] sm:$0xff]
          %v699 = vld [vmem:[#allocation3 + $0x6e0] sm:$0xff]
          %v700 = vld [vmem:[#allocation3 + $0x6e8] sm:$0xff]
          %v701 = vld [vmem:[#allocation3 + $0x6f0] sm:$0xff]
          %v702 = vld [vmem:[#allocation3 + $0x6f8] sm:$0xff]
          %v703 = vld [vmem:[#allocation3 + $0x700] sm:$0xff]
          %v704 = vld [vmem:[#allocation3 + $0x708] sm:$0xff]
          %v705 = vld [vmem:[#allocation3 + $0x710] sm:$0xff]
          %v706 = vld [vmem:[#allocation3 + $0x718] sm:$0xff]
          %v707 = vld [vmem:[#allocation3 + $0x720] sm:$0xff]
          %v708 = vld [vmem:[#allocation3 + $0x728] sm:$0xff]
          %v709 = vld [vmem:[#allocation3 + $0x730] sm:$0xff]
          %v710 = vld [vmem:[#allocation3 + $0x738] sm:$0xff]
          %v711 = vld [vmem:[#allocation3 + $0x740] sm:$0xff]
          %v712 = vld [vmem:[#allocation3 + $0x748] sm:$0xff]
          %v713 = vld [vmem:[#allocation3 + $0x750] sm:$0xff]
          %v714 = vld [vmem:[#allocation3 + $0x758] sm:$0xff]
          %v715 = vld [vmem:[#allocation3 + $0x760] sm:$0xff]
          %v716 = vld [vmem:[#allocation3 + $0x768] sm:$0xff]
          %v717 = vld [vmem:[#allocation3 + $0x770] sm:$0xff]
          %v718 = vld [vmem:[#allocation3 + $0x778] sm:$0xff]
          %v719 = vld [vmem:[#allocation3 + $0x780] sm:$0xff]
          %v720 = vld [vmem:[#allocation3 + $0x788] sm:$0xff]
          %v721 = vld [vmem:[#allocation3 + $0x790] sm:$0xff]
          %v722 = vld [vmem:[#allocation3 + $0x798] sm:$0xff]
          %v723 = vld [vmem:[#allocation3 + $0x7a0] sm:$0xff]
          %v724 = vld [vmem:[#allocation3 + $0x7a8] sm:$0xff]
          %v725 = vld [vmem:[#allocation3 + $0x7b0] sm:$0xff]
          %v726 = vld [vmem:[#allocation3 + $0x7b8] sm:$0xff]
          %v727 = vld [vmem:[#allocation3 + $0x7c0] sm:$0xff]
          %v728 = vld [vmem:[#allocation3 + $0x7c8] sm:$0xff]
          %v729 = vld [vmem:[#allocation3 + $0x7d0] sm:$0xff]
          %v730 = vld [vmem:[#allocation3 + $0x7d8] sm:$0xff]
          %v731 = vld [vmem:[#allocation3 + $0x7e0] sm:$0xff]
          %v732 = vld [vmem:[#allocation3 + $0x7e8] sm:$0xff]
          %v733 = vld [vmem:[#allocation3 + $0x7f0] sm:$0xff]
          %v734 = vld [vmem:[#allocation3 + $0x7f8] sm:$0xff]
          %v735 = vld [vmem:[#allocation3 + $0x800] sm:$0xff]
          %v736 = vld [vmem:[#allocation3 + $0x808] sm:$0xff]
          %v737 = vld [vmem:[#allocation3 + $0x810] sm:$0xff]
          %v738 = vld [vmem:[#allocation3 + $0x818] sm:$0xff]
          %v739 = vld [vmem:[#allocation3 + $0x820] sm:$0xff]
          %v740 = vld [vmem:[#allocation3 + $0x828] sm:$0xff]
          %v741 = vld [vmem:[#allocation3 + $0x830] sm:$0xff]
          %v742 = vld [vmem:[#allocation3 + $0x838] sm:$0xff]
          %v743 = vld [vmem:[#allocation3 + $0x840] sm:$0xff]
          %v744 = vld [vmem:[#allocation3 + $0x848] sm:$0xff]
          %v745 = vld [vmem:[#allocation3 + $0x850] sm:$0xff]
          %v746 = vld [vmem:[#allocation3 + $0x858] sm:$0xff]
          %v747 = vld [vmem:[#allocation3 + $0x860] sm:$0xff]
          %v748 = vld [vmem:[#allocation3 + $0x868] sm:$0xff]
          %v749 = vld [vmem:[#allocation3 + $0x870] sm:$0xff]
          %v750 = vld [vmem:[#allocation3 + $0x878] sm:$0xff]
          %v751 = vld [vmem:[#allocation3 + $0x880] sm:$0xff]
          %v752 = vld [vmem:[#allocation3 + $0x888] sm:$0xff]
          %v753 = vld [vmem:[#allocation3 + $0x890] sm:$0xff]
          %v754 = vld [vmem:[#allocation3 + $0x898] sm:$0xff]
          %v755 = vld [vmem:[#allocation3 + $0x8a0] sm:$0xff]
          %v756 = vld [vmem:[#allocation3 + $0x8a8] sm:$0xff]
          %v757 = vld [vmem:[#allocation3 + $0x8b0] sm:$0xff]
          %v758 = vld [vmem:[#allocation3 + $0x8b8] sm:$0xff]
          %v759 = vld [vmem:[#allocation3 + $0x8c0] sm:$0xff]
          %v760 = vld [vmem:[#allocation3 + $0x8c8] sm:$0xff]
          %v761 = vld [vmem:[#allocation3 + $0x8d0] sm:$0xff]
          %v762 = vld [vmem:[#allocation3 + $0x8d8] sm:$0xff]
          %v763 = vld [vmem:[#allocation3 + $0x8e0] sm:$0xff]
          %v764 = vld [vmem:[#allocation3 + $0x8e8] sm:$0xff]
          %v765 = vld [vmem:[#allocation3 + $0x8f0] sm:$0xff]
          %v766 = vld [vmem:[#allocation3 + $0x8f8] sm:$0xff]
          %v767 = vld [vmem:[#allocation3 + $0x900] sm:$0xff]
          %v768 = vld [vmem:[#allocation3 + $0x908] sm:$0xff]
          %v769 = vld [vmem:[#allocation3 + $0x910] sm:$0xff]
          %v770 = vld [vmem:[#allocation3 + $0x918] sm:$0xff]
          %v771 = vld [vmem:[#allocation3 + $0x920] sm:$0xff]
          %v772 = vld [vmem:[#allocation3 + $0x928] sm:$0xff]
          %v773 = vld [vmem:[#allocation3 + $0x930] sm:$0xff]
          %v774 = vld [vmem:[#allocation3 + $0x938] sm:$0xff]
          %v775 = vld [vmem:[#allocation3 + $0x940] sm:$0xff]
          %v776 = vld [vmem:[#allocation3 + $0x948] sm:$0xff]
          %v777 = vld [vmem:[#allocation3 + $0x950] sm:$0xff]
          %v778 = vld [vmem:[#allocation3 + $0x958] sm:$0xff]
          %v779 = vld [vmem:[#allocation3 + $0x960] sm:$0xff]
          %v780 = vld [vmem:[#allocation3 + $0x968] sm:$0xff]
          %v781 = vld [vmem:[#allocation3 + $0x970] sm:$0xff]
          %v782 = vld [vmem:[#allocation3 + $0x978] sm:$0xff]
          %v783 = vld [vmem:[#allocation3 + $0x980] sm:$0xff]
          %v784 = vld [vmem:[#allocation3 + $0x988] sm:$0xff]
          %v785 = vld [vmem:[#allocation3 + $0x990] sm:$0xff]
          %v786 = vld [vmem:[#allocation3 + $0x998] sm:$0xff]
          %v787 = vld [vmem:[#allocation3 + $0x9a0] sm:$0xff]
          %v788 = vld [vmem:[#allocation3 + $0x9a8] sm:$0xff]
          %v789 = vld [vmem:[#allocation3 + $0x9b0] sm:$0xff]
          %v790 = vld [vmem:[#allocation3 + $0x9b8] sm:$0xff]
          %v791 = vld [vmem:[#allocation3 + $0x9c0] sm:$0xff]
          %v792 = vld [vmem:[#allocation3 + $0x9c8] sm:$0xff]
          %v793 = vld [vmem:[#allocation3 + $0x9d0] sm:$0xff]
          %v794 = vld [vmem:[#allocation3 + $0x9d8] sm:$0xff]
          %v795 = vld [vmem:[#allocation3 + $0x9e0] sm:$0xff]
          %v796 = vld [vmem:[#allocation3 + $0x9e8] sm:$0xff]
          %v797 = vld [vmem:[#allocation3 + $0x9f0] sm:$0xff]
          %v798 = vld [vmem:[#allocation3 + $0x9f8] sm:$0xff]
          %v799 = vld [vmem:[#allocation3 + $0xa00] sm:$0xff]
          %v800 = vld [vmem:[#allocation3 + $0xa08] sm:$0xff]
          %v801 = vld [vmem:[#allocation3 + $0xa10] sm:$0xff]
          %v802 = vld [vmem:[#allocation3 + $0xa18] sm:$0xff]
          %v803 = vld [vmem:[#allocation3 + $0xa20] sm:$0xff]
          %v804 = vld [vmem:[#allocation3 + $0xa28] sm:$0xff]
          %v805 = vld [vmem:[#allocation3 + $0xa30] sm:$0xff]
          %v806 = vld [vmem:[#allocation3 + $0xa38] sm:$0xff]
          %v807 = vld [vmem:[#allocation3 + $0xa40] sm:$0xff]
          %v808 = vld [vmem:[#allocation3 + $0xa48] sm:$0xff]
          %v809 = vld [vmem:[#allocation3 + $0xa50] sm:$0xff]
          %v810 = vld [vmem:[#allocation3 + $0xa58] sm:$0xff]
          %v811 = vld [vmem:[#allocation3 + $0xa60] sm:$0xff]
          %v812 = vld [vmem:[#allocation3 + $0xa68] sm:$0xff]
          %v813 = vld [vmem:[#allocation3 + $0xa70] sm:$0xff]
          %v814 = vld [vmem:[#allocation3 + $0xa78] sm:$0xff]
          %v815 = vld [vmem:[#allocation3 + $0xa80] sm:$0xff]
          %v816 = vld [vmem:[#allocation3 + $0xa88] sm:$0xff]
          %v817 = vld [vmem:[#allocation3 + $0xa90] sm:$0xff]
          %v818 = vld [vmem:[#allocation3 + $0xa98] sm:$0xff]
          %v819 = vld [vmem:[#allocation3 + $0xaa0] sm:$0xff]
          %v820 = vld [vmem:[#allocation3 + $0xaa8] sm:$0xff]
          %v821 = vld [vmem:[#allocation3 + $0xab0] sm:$0xff]
          %v822 = vld [vmem:[#allocation3 + $0xab8] sm:$0xff]
          %v823 = vld [vmem:[#allocation3 + $0xac0] sm:$0xff]
          %v824 = vld [vmem:[#allocation3 + $0xac8] sm:$0xff]
          %v825 = vld [vmem:[#allocation3 + $0xad0] sm:$0xff]
          %v826 = vld [vmem:[#allocation3 + $0xad8] sm:$0xff]
          %v827 = vld [vmem:[#allocation3 + $0xae0] sm:$0xff]
          %v828 = vld [vmem:[#allocation3 + $0xae8] sm:$0xff]
          %v829 = vld [vmem:[#allocation3 + $0xaf0] sm:$0xff]
          %v830 = vld [vmem:[#allocation3 + $0xaf8] sm:$0xff]
          %v831 = vld [vmem:[#allocation3 + $0xb00] sm:$0xff]
          %v832 = vld [vmem:[#allocation3 + $0xb08] sm:$0xff]
          %v833 = vld [vmem:[#allocation3 + $0xb10] sm:$0xff]
          %v834 = vld [vmem:[#allocation3 + $0xb18] sm:$0xff]
          %v835 = vld [vmem:[#allocation3 + $0xb20] sm:$0xff]
          %v836 = vld [vmem:[#allocation3 + $0xb28] sm:$0xff]
          %v837 = vld [vmem:[#allocation3 + $0xb30] sm:$0xff]
          %v838 = vld [vmem:[#allocation3 + $0xb38] sm:$0xff]
          %v839 = vld [vmem:[#allocation3 + $0xb40] sm:$0xff]
          %v840 = vld [vmem:[#allocation3 + $0xb48] sm:$0xff]
          %v841 = vld [vmem:[#allocation3 + $0xb50] sm:$0xff]
          %v842 = vld [vmem:[#allocation3 + $0xb58] sm:$0xff]
          %v843 = vld [vmem:[#allocation3 + $0xb60] sm:$0xff]
          %v844 = vld [vmem:[#allocation3 + $0xb68] sm:$0xff]
          %v845 = vld [vmem:[#allocation3 + $0xb70] sm:$0xff]
          %v846 = vld [vmem:[#allocation3 + $0xb78] sm:$0xff]
          %v847 = vld [vmem:[#allocation3 + $0xb80] sm:$0xff]
          %v848 = vld [vmem:[#allocation3 + $0xb88] sm:$0xff]
          %v849 = vld [vmem:[#allocation3 + $0xb90] sm:$0xff]
          %v850 = vld [vmem:[#allocation3 + $0xb98] sm:$0xff]
          %v851 = vld [vmem:[#allocation3 + $0xba0] sm:$0xff]
          %v852 = vld [vmem:[#allocation3 + $0xba8] sm:$0xff]
          %v853 = vld [vmem:[#allocation3 + $0xbb0] sm:$0xff]
          %v854 = vld [vmem:[#allocation3 + $0xbb8] sm:$0xff]
          %v855 = vld [vmem:[#allocation3 + $0xbc0] sm:$0xff]
          %v856 = vld [vmem:[#allocation3 + $0xbc8] sm:$0xff]
          %v857 = vld [vmem:[#allocation3 + $0xbd0] sm:$0xff]
          %v858 = vld [vmem:[#allocation3 + $0xbd8] sm:$0xff]
          %v859 = vld [vmem:[#allocation3 + $0xbe0] sm:$0xff]
          %v860 = vld [vmem:[#allocation3 + $0xbe8] sm:$0xff]
          %v861 = vld [vmem:[#allocation3 + $0xbf0] sm:$0xff]
          %v862 = vld [vmem:[#allocation3 + $0xbf8] sm:$0xff]
          %v863 = vld [vmem:[#allocation3 + $0xc00] sm:$0xff]
          %v864 = vld [vmem:[#allocation3 + $0xc08] sm:$0xff]
          %v865 = vld [vmem:[#allocation3 + $0xc10] sm:$0xff]
          %v866 = vld [vmem:[#allocation3 + $0xc18] sm:$0xff]
          %v867 = vld [vmem:[#allocation3 + $0xc20] sm:$0xff]
          %v868 = vld [vmem:[#allocation3 + $0xc28] sm:$0xff]
          %v869 = vld [vmem:[#allocation3 + $0xc30] sm:$0xff]
          %v870 = vld [vmem:[#allocation3 + $0xc38] sm:$0xff]
          %v871 = vld [vmem:[#allocation3 + $0xc40] sm:$0xff]
          %v872 = vld [vmem:[#allocation3 + $0xc48] sm:$0xff]
          %v873 = vld [vmem:[#allocation3 + $0xc50] sm:$0xff]
          %v874 = vld [vmem:[#allocation3 + $0xc58] sm:$0xff]
          %v875 = vld [vmem:[#allocation3 + $0xc60] sm:$0xff]
          %v876 = vld [vmem:[#allocation3 + $0xc68] sm:$0xff]
          %v877 = vld [vmem:[#allocation3 + $0xc70] sm:$0xff]
          %v878 = vld [vmem:[#allocation3 + $0xc78] sm:$0xff]
          %v879 = vld [vmem:[#allocation3 + $0xc80] sm:$0xff]
          %v880 = vld [vmem:[#allocation3 + $0xc88] sm:$0xff]
          %v881 = vld [vmem:[#allocation3 + $0xc90] sm:$0xff]
          %v882 = vld [vmem:[#allocation3 + $0xc98] sm:$0xff]
          %v883 = vld [vmem:[#allocation3 + $0xca0] sm:$0xff]
          %v884 = vld [vmem:[#allocation3 + $0xca8] sm:$0xff]
          %v885 = vld [vmem:[#allocation3 + $0xcb0] sm:$0xff]
          %v886 = vld [vmem:[#allocation3 + $0xcb8] sm:$0xff]
          %v887 = vld [vmem:[#allocation3 + $0xcc0] sm:$0xff]
          %v888 = vld [vmem:[#allocation3 + $0xcc8] sm:$0xff]
          %v889 = vld [vmem:[#allocation3 + $0xcd0] sm:$0xff]
          %v890 = vld [vmem:[#allocation3 + $0xcd8] sm:$0xff]
          %v891 = vld [vmem:[#allocation3 + $0xce0] sm:$0xff]
          %v892 = vld [vmem:[#allocation3 + $0xce8] sm:$0xff]
          %v893 = vld [vmem:[#allocation3 + $0xcf0] sm:$0xff]
          %v894 = vld [vmem:[#allocation3 + $0xcf8] sm:$0xff]
          %v895 = vld [vmem:[#allocation3 + $0xd00] sm:$0xff]
          %v896 = vld [vmem:[#allocation3 + $0xd08] sm:$0xff]
          %v897 = vld [vmem:[#allocation3 + $0xd10] sm:$0xff]
          %v898 = vld [vmem:[#allocation3 + $0xd18] sm:$0xff]
          %v899 = vld [vmem:[#allocation3 + $0xd20] sm:$0xff]
          %v900 = vld [vmem:[#allocation3 + $0xd28] sm:$0xff]
          %v901 = vld [vmem:[#allocation3 + $0xd30] sm:$0xff]
          %v902 = vld [vmem:[#allocation3 + $0xd38] sm:$0xff]
          %v903 = vld [vmem:[#allocation3 + $0xd40] sm:$0xff]
          %v904 = vld [vmem:[#allocation3 + $0xd48] sm:$0xff]
          %v905 = vld [vmem:[#allocation3 + $0xd50] sm:$0xff]
          %v906 = vld [vmem:[#allocation3 + $0xd58] sm:$0xff]
          %v907 = vld [vmem:[#allocation3 + $0xd60] sm:$0xff]
          %v908 = vld [vmem:[#allocation3 + $0xd68] sm:$0xff]
          %v909 = vld [vmem:[#allocation3 + $0xd70] sm:$0xff]
          %v910 = vld [vmem:[#allocation3 + $0xd78] sm:$0xff]
          %v911 = vld [vmem:[#allocation3 + $0xd80] sm:$0xff]
          %v912 = vld [vmem:[#allocation3 + $0xd88] sm:$0xff]
          %v913 = vld [vmem:[#allocation3 + $0xd90] sm:$0xff]
          %v914 = vld [vmem:[#allocation3 + $0xd98] sm:$0xff]
          %v915 = vld [vmem:[#allocation3 + $0xda0] sm:$0xff]
          %v916 = vld [vmem:[#allocation3 + $0xda8] sm:$0xff]
          %v917 = vld [vmem:[#allocation3 + $0xdb0] sm:$0xff]
          %v918 = vld [vmem:[#allocation3 + $0xdb8] sm:$0xff]
          %v919 = vld [vmem:[#allocation3 + $0xdc0] sm:$0xff]
          %v920 = vld [vmem:[#allocation3 + $0xdc8] sm:$0xff]
          %v921 = vld [vmem:[#allocation3 + $0xdd0] sm:$0xff]
          %v922 = vld [vmem:[#allocation3 + $0xdd8] sm:$0xff]
          %v923 = vld [vmem:[#allocation3 + $0xde0] sm:$0xff]
          %v924 = vld [vmem:[#allocation3 + $0xde8] sm:$0xff]
          %v925 = vld [vmem:[#allocation3 + $0xdf0] sm:$0xff]
          %v926 = vld [vmem:[#allocation3 + $0xdf8] sm:$0xff]
          %v927 = vld [vmem:[#allocation3 + $0xe00] sm:$0xff]
          %v928 = vld [vmem:[#allocation3 + $0xe08] sm:$0xff]
          %v929 = vld [vmem:[#allocation3 + $0xe10] sm:$0xff]
          %v930 = vld [vmem:[#allocation3 + $0xe18] sm:$0xff]
          %v931 = vld [vmem:[#allocation3 + $0xe20] sm:$0xff]
          %v932 = vld [vmem:[#allocation3 + $0xe28] sm:$0xff]
          %v933 = vld [vmem:[#allocation3 + $0xe30] sm:$0xff]
          %v934 = vld [vmem:[#allocation3 + $0xe38] sm:$0xff]
          %v935 = vld [vmem:[#allocation3 + $0xe40] sm:$0xff]
          %v936 = vld [vmem:[#allocation3 + $0xe48] sm:$0xff]
          %v937 = vld [vmem:[#allocation3 + $0xe50] sm:$0xff]
          %v938 = vld [vmem:[#allocation3 + $0xe58] sm:$0xff]
          %v939 = vld [vmem:[#allocation3 + $0xe60] sm:$0xff]
          %v940 = vld [vmem:[#allocation3 + $0xe68] sm:$0xff]
          %v941 = vld [vmem:[#allocation3 + $0xe70] sm:$0xff]
          %v942 = vld [vmem:[#allocation3 + $0xe78] sm:$0xff]
          %v943 = vld [vmem:[#allocation3 + $0xe80] sm:$0xff]
          %v944 = vld [vmem:[#allocation3 + $0xe88] sm:$0xff]
          %v945 = vld [vmem:[#allocation3 + $0xe90] sm:$0xff]
          %v946 = vld [vmem:[#allocation3 + $0xe98] sm:$0xff]
          %v947 = vld [vmem:[#allocation3 + $0xea0] sm:$0xff]
          %v948 = vld [vmem:[#allocation3 + $0xea8] sm:$0xff]
          %v949 = vld [vmem:[#allocation3 + $0xeb0] sm:$0xff]
          %v950 = vld [vmem:[#allocation3 + $0xeb8] sm:$0xff]
          %v951 = vld [vmem:[#allocation3 + $0xec0] sm:$0xff]
          %v952 = vld [vmem:[#allocation3 + $0xec8] sm:$0xff]
          %v953 = vld [vmem:[#allocation3 + $0xed0] sm:$0xff]
          %v954 = vld [vmem:[#allocation3 + $0xed8] sm:$0xff]
          %v955 = vld [vmem:[#allocation3 + $0xee0] sm:$0xff]
          %v956 = vld [vmem:[#allocation3 + $0xee8] sm:$0xff]
          %v957 = vld [vmem:[#allocation3 + $0xef0] sm:$0xff]
          %v958 = vld [vmem:[#allocation3 + $0xef8] sm:$0xff]
          %v959 = vld [vmem:[#allocation3 + $0xf00] sm:$0xff]
          %v960 = vld [vmem:[#allocation3 + $0xf08] sm:$0xff]
          %v961 = vld [vmem:[#allocation3 + $0xf10] sm:$0xff]
          %v962 = vld [vmem:[#allocation3 + $0xf18] sm:$0xff]
          %v963 = vld [vmem:[#allocation3 + $0xf20] sm:$0xff]
          %v964 = vld [vmem:[#allocation3 + $0xf28] sm:$0xff]
          %v965 = vld [vmem:[#allocation3 + $0xf30] sm:$0xff]
          %v966 = vld [vmem:[#allocation3 + $0xf38] sm:$0xff]
          %v967 = vld [vmem:[#allocation3 + $0xf40] sm:$0xff]
          %v968 = vld [vmem:[#allocation3 + $0xf48] sm:$0xff]
          %v969 = vld [vmem:[#allocation3 + $0xf50] sm:$0xff]
          %v970 = vld [vmem:[#allocation3 + $0xf58] sm:$0xff]
          %v971 = vld [vmem:[#allocation3 + $0xf60] sm:$0xff]
          %v972 = vld [vmem:[#allocation3 + $0xf68] sm:$0xff]
          %v973 = vld [vmem:[#allocation3 + $0xf70] sm:$0xff]
          %v974 = vld [vmem:[#allocation3 + $0xf78] sm:$0xff]
          %v975 = vld [vmem:[#allocation3 + $0xf80] sm:$0xff]
          %v976 = vld [vmem:[#allocation3 + $0xf88] sm:$0xff]
          %v977 = vld [vmem:[#allocation3 + $0xf90] sm:$0xff]
          %v978 = vld [vmem:[#allocation3 + $0xf98] sm:$0xff]
          %v979 = vld [vmem:[#allocation3 + $0xfa0] sm:$0xff]
          %v980 = vld [vmem:[#allocation3 + $0xfa8] sm:$0xff]
          %v981 = vld [vmem:[#allocation3 + $0xfb0] sm:$0xff]
          %v982 = vld [vmem:[#allocation3 + $0xfb8] sm:$0xff]
          %v983 = vld [vmem:[#allocation3 + $0xfc0] sm:$0xff]
          %v984 = vld [vmem:[#allocation3 + $0xfc8] sm:$0xff]
          %v985 = vld [vmem:[#allocation3 + $0xfd0] sm:$0xff]
          %v986 = vld [vmem:[#allocation3 + $0xfd8] sm:$0xff]
          %v987 = vld [vmem:[#allocation3 + $0xfe0] sm:$0xff]
          %v988 = vld [vmem:[#allocation3 + $0xfe8] sm:$0xff]
          %v989 = vld [vmem:[#allocation3 + $0xff0] sm:$0xff]
          %v990 = vld [vmem:[#allocation3 + $0xff8] sm:$0xff]
          %v991 = vld [vmem:[#allocation3 + $0x1000] sm:$0xff]
          %v992 = vld [vmem:[#allocation3 + $0x1008] sm:$0xff]
          %v993 = vld [vmem:[#allocation3 + $0x1010] sm:$0xff]
          %v994 = vld [vmem:[#allocation3 + $0x1018] sm:$0xff]
          %v995 = vld [vmem:[#allocation3 + $0x1020] sm:$0xff]
          %v996 = vld [vmem:[#allocation3 + $0x1028] sm:$0xff]
          %v997 = vld [vmem:[#allocation3 + $0x1030] sm:$0xff]
          %v998 = vld [vmem:[#allocation3 + $0x1038] sm:$0xff]
          %v999 = vld [vmem:[#allocation3 + $0x1040] sm:$0xff]
          %v1000 = vld [vmem:[#allocation3 + $0x1048] sm:$0xff]
          %v1001 = vld [vmem:[#allocation3 + $0x1050] sm:$0xff]
          %v1002 = vld [vmem:[#allocation3 + $0x1058] sm:$0xff]
          %v1003 = vld [vmem:[#allocation3 + $0x1060] sm:$0xff]
          %v1004 = vld [vmem:[#allocation3 + $0x1068] sm:$0xff]
          %v1005 = vld [vmem:[#allocation3 + $0x1070] sm:$0xff]
          %v1006 = vld [vmem:[#allocation3 + $0x1078] sm:$0xff]
          %v1007 = vld [vmem:[#allocation5] sm:$0x1]
          %v1009 = vperm.slane %v1007, 0
          %1011 = vmatpush.msra.mxu0 %v494
          %1012 = vmatpush.msra.mxu0 %v493
          %1013 = vmatpush.msra.mxu0 %v492
          %1014 = vmatpush.msra.mxu0 %v491
          %1015 = vmatpush.msra.mxu0 %v490
          %1016 = vmatpush.msra.mxu0 %v489
          %1017 = vmatpush.msra.mxu0 %v488
          %1018 = vmatpush.msra.mxu0 %v487
          %1019 = vmatpush.msra.mxu0 %v486
          %1020 = vmatpush.msra.mxu0 %v485
          %1021 = vmatpush.msra.mxu0 %v484
          %1022 = vmatpush.msra.mxu0 %v483
          %1023 = vmatpush.msra.mxu0 %v482
          %1024 = vmatpush.msra.mxu0 %v481
          %1025 = vmatpush.msra.mxu0 %v480
          %1026 = vmatpush.msra.mxu0 %v479
          %1027 = vmatmul.f32.gmra.mxu0 %v446
          %v1028 = vpop.f32.mrf.mxu0
          %v1029 = vadd.f32 %v1009, %v1028
          %1030 = vdwg.mxu0
          %1031 = vmatpush.msra.mxu0 %v510
          %1032 = vmatpush.msra.mxu0 %v509
          %1033 = vmatpush.msra.mxu0 %v508
          %1034 = vmatpush.msra.mxu0 %v507
          %1035 = vmatpush.msra.mxu0 %v506
          %1036 = vmatpush.msra.mxu0 %v505
          %1037 = vmatpush.msra.mxu0 %v504
          %1038 = vmatpush.msra.mxu0 %v503
          %1039 = vmatpush.msra.mxu0 %v502
          %1040 = vmatpush.msra.mxu0 %v501
          %1041 = vmatpush.msra.mxu0 %v500
          %1042 = vmatpush.msra.mxu0 %v499
          %1043 = vmatpush.msra.mxu0 %v498
          %1044 = vmatpush.msra.mxu0 %v497
          %1045 = vmatpush.msra.mxu0 %v496
          %1046 = vmatpush.msra.mxu0 %v495
          %1047 = vmatmul.f32.gmra.mxu0 %v447
          %v1048 = vpop.f32.mrf.mxu0
          %v1049 = vadd.f32 %v1029, %v1048
          %1050 = vdwg.mxu0
          %1051 = vmatpush.msra.mxu0 %v526
          %1052 = vmatpush.msra.mxu0 %v525
          %1053 = vmatpush.msra.mxu0 %v524
          %1054 = vmatpush.msra.mxu0 %v523
          %1055 = vmatpush.msra.mxu0 %v522
          %1056 = vmatpush.msra.mxu0 %v521
          %1057 = vmatpush.msra.mxu0 %v520
          %1058 = vmatpush.msra.mxu0 %v519
          %1059 = vmatpush.msra.mxu0 %v518
          %1060 = vmatpush.msra.mxu0 %v517
          %1061 = vmatpush.msra.mxu0 %v516
          %1062 = vmatpush.msra.mxu0 %v515
          %1063 = vmatpush.msra.mxu0 %v514
          %1064 = vmatpush.msra.mxu0 %v513
          %1065 = vmatpush.msra.mxu0 %v512
          %1066 = vmatpush.msra.mxu0 %v511
          %1067 = vmatmul.f32.gmra.mxu0 %v448
          %v1068 = vpop.f32.mrf.mxu0
          %v1069 = vadd.f32 %v1049, %v1068
          %1070 = vdwg.mxu0
          %1071 = vmatpush.msra.mxu0 %v542
          %1072 = vmatpush.msra.mxu0 %v541
          %1073 = vmatpush.msra.mxu0 %v540
          %1074 = vmatpush.msra.mxu0 %v539
          %1075 = vmatpush.msra.mxu0 %v538
          %1076 = vmatpush.msra.mxu0 %v537
          %1077 = vmatpush.msra.mxu0 %v536
          %1078 = vmatpush.msra.mxu0 %v535
          %1079 = vmatpush.msra.mxu0 %v534
          %1080 = vmatpush.msra.mxu0 %v533
          %1081 = vmatpush.msra.mxu0 %v532
          %1082 = vmatpush.msra.mxu0 %v531
          %1083 = vmatpush.msra.mxu0 %v530
          %1084 = vmatpush.msra.mxu0 %v529
          %1085 = vmatpush.msra.mxu0 %v528
          %1086 = vmatpush.msra.mxu0 %v527
          %1087 = vmatmul.f32.gmra.mxu0 %v449
          %v1088 = vpop.f32.mrf.mxu0
          %v1089 = vadd.f32 %v1069, %v1088
          %1090 = vdwg.mxu0
          %1091 = vmatpush.msra.mxu0 %v558
          %1092 = vmatpush.msra.mxu0 %v557
          %1093 = vmatpush.msra.mxu0 %v556
          %1094 = vmatpush.msra.mxu0 %v555
          %1095 = vmatpush.msra.mxu0 %v554
          %1096 = vmatpush.msra.mxu0 %v553
          %1097 = vmatpush.msra.mxu0 %v552
          %1098 = vmatpush.msra.mxu0 %v551
          %1099 = vmatpush.msra.mxu0 %v550
          %1100 = vmatpush.msra.mxu0 %v549
          %1101 = vmatpush.msra.mxu0 %v548
          %1102 = vmatpush.msra.mxu0 %v547
          %1103 = vmatpush.msra.mxu0 %v546
          %1104 = vmatpush.msra.mxu0 %v545
          %1105 = vmatpush.msra.mxu0 %v544
          %1106 = vmatpush.msra.mxu0 %v543
          %1107 = vmatmul.f32.gmra.mxu0 %v450
          %v1108 = vpop.f32.mrf.mxu0
          %v1109 = vadd.f32 %v1089, %v1108
          %1110 = vdwg.mxu0
          %1111 = vmatpush.msra.mxu0 %v574
          %1112 = vmatpush.msra.mxu0 %v573
          %1113 = vmatpush.msra.mxu0 %v572
          %1114 = vmatpush.msra.mxu0 %v571
          %1115 = vmatpush.msra.mxu0 %v570
          %1116 = vmatpush.msra.mxu0 %v569
          %1117 = vmatpush.msra.mxu0 %v568
          %1118 = vmatpush.msra.mxu0 %v567
          %1119 = vmatpush.msra.mxu0 %v566
          %1120 = vmatpush.msra.mxu0 %v565
          %1121 = vmatpush.msra.mxu0 %v564
          %1122 = vmatpush.msra.mxu0 %v563
          %1123 = vmatpush.msra.mxu0 %v562
          %1124 = vmatpush.msra.mxu0 %v561
          %1125 = vmatpush.msra.mxu0 %v560
          %1126 = vmatpush.msra.mxu0 %v559
          %1127 = vmatmul.f32.gmra.mxu0 %v451
          %v1128 = vpop.f32.mrf.mxu0
          %v1129 = vadd.f32 %v1109, %v1128
          %1130 = vdwg.mxu0
          %1131 = vmatpush.msra.mxu0 %v590
          %1132 = vmatpush.msra.mxu0 %v589
          %1133 = vmatpush.msra.mxu0 %v588
          %1134 = vmatpush.msra.mxu0 %v587
          %1135 = vmatpush.msra.mxu0 %v586
          %1136 = vmatpush.msra.mxu0 %v585
          %1137 = vmatpush.msra.mxu0 %v584
          %1138 = vmatpush.msra.mxu0 %v583
          %1139 = vmatpush.msra.mxu0 %v582
          %1140 = vmatpush.msra.mxu0 %v581
          %1141 = vmatpush.msra.mxu0 %v580
          %1142 = vmatpush.msra.mxu0 %v579
          %1143 = vmatpush.msra.mxu0 %v578
          %1144 = vmatpush.msra.mxu0 %v577
          %1145 = vmatpush.msra.mxu0 %v576
          %1146 = vmatpush.msra.mxu0 %v575
          %1147 = vmatmul.f32.gmra.mxu0 %v452
          %v1148 = vpop.f32.mrf.mxu0
          %v1149 = vadd.f32 %v1129, %v1148
          %1150 = vdwg.mxu0
          %1151 = vmatpush.msra.mxu0 %v606
          %1152 = vmatpush.msra.mxu0 %v605
          %1153 = vmatpush.msra.mxu0 %v604
          %1154 = vmatpush.msra.mxu0 %v603
          %1155 = vmatpush.msra.mxu0 %v602
          %1156 = vmatpush.msra.mxu0 %v601
          %1157 = vmatpush.msra.mxu0 %v600
          %1158 = vmatpush.msra.mxu0 %v599
          %1159 = vmatpush.msra.mxu0 %v598
          %1160 = vmatpush.msra.mxu0 %v597
          %1161 = vmatpush.msra.mxu0 %v596
          %1162 = vmatpush.msra.mxu0 %v595
          %1163 = vmatpush.msra.mxu0 %v594
          %1164 = vmatpush.msra.mxu0 %v593
          %1165 = vmatpush.msra.mxu0 %v592
          %1166 = vmatpush.msra.mxu0 %v591
          %1167 = vmatmul.f32.gmra.mxu0 %v453
          %v1168 = vpop.f32.mrf.mxu0
          %v1169 = vadd.f32 %v1149, %v1168
          %1170 = vdwg.mxu0
          %1171 = vmatpush.msra.mxu0 %v622
          %1172 = vmatpush.msra.mxu0 %v621
          %1173 = vmatpush.msra.mxu0 %v620
          %1174 = vmatpush.msra.mxu0 %v619
          %1175 = vmatpush.msra.mxu0 %v618
          %1176 = vmatpush.msra.mxu0 %v617
          %1177 = vmatpush.msra.mxu0 %v616
          %1178 = vmatpush.msra.mxu0 %v615
          %1179 = vmatpush.msra.mxu0 %v614
          %1180 = vmatpush.msra.mxu0 %v613
          %1181 = vmatpush.msra.mxu0 %v612
          %1182 = vmatpush.msra.mxu0 %v611
          %1183 = vmatpush.msra.mxu0 %v610
          %1184 = vmatpush.msra.mxu0 %v609
          %1185 = vmatpush.msra.mxu0 %v608
          %1186 = vmatpush.msra.mxu0 %v607
          %1187 = vmatmul.f32.gmra.mxu0 %v454
          %v1188 = vpop.f32.mrf.mxu0
          %v1189 = vadd.f32 %v1169, %v1188
          %1190 = vdwg.mxu0
          %1191 = vmatpush.msra.mxu0 %v638
          %1192 = vmatpush.msra.mxu0 %v637
          %1193 = vmatpush.msra.mxu0 %v636
          %1194 = vmatpush.msra.mxu0 %v635
          %1195 = vmatpush.msra.mxu0 %v634
          %1196 = vmatpush.msra.mxu0 %v633
          %1197 = vmatpush.msra.mxu0 %v632
          %1198 = vmatpush.msra.mxu0 %v631
          %1199 = vmatpush.msra.mxu0 %v630
          %1200 = vmatpush.msra.mxu0 %v629
          %1201 = vmatpush.msra.mxu0 %v628
          %1202 = vmatpush.msra.mxu0 %v627
          %1203 = vmatpush.msra.mxu0 %v626
          %1204 = vmatpush.msra.mxu0 %v625
          %1205 = vmatpush.msra.mxu0 %v624
          %1206 = vmatpush.msra.mxu0 %v623
          %1207 = vmatmul.f32.gmra.mxu0 %v455
          %v1208 = vpop.f32.mrf.mxu0
          %v1209 = vadd.f32 %v1189, %v1208
          %1210 = vdwg.mxu0
          %1211 = vmatpush.msra.mxu0 %v654
          %1212 = vmatpush.msra.mxu0 %v653
          %1213 = vmatpush.msra.mxu0 %v652
          %1214 = vmatpush.msra.mxu0 %v651
          %1215 = vmatpush.msra.mxu0 %v650
          %1216 = vmatpush.msra.mxu0 %v649
          %1217 = vmatpush.msra.mxu0 %v648
          %1218 = vmatpush.msra.mxu0 %v647
          %1219 = vmatpush.msra.mxu0 %v646
          %1220 = vmatpush.msra.mxu0 %v645
          %1221 = vmatpush.msra.mxu0 %v644
          %1222 = vmatpush.msra.mxu0 %v643
          %1223 = vmatpush.msra.mxu0 %v642
          %1224 = vmatpush.msra.mxu0 %v641
          %1225 = vmatpush.msra.mxu0 %v640
          %1226 = vmatpush.msra.mxu0 %v639
          %1227 = vmatmul.f32.gmra.mxu0 %v456
          %v1228 = vpop.f32.mrf.mxu0
          %v1229 = vadd.f32 %v1209, %v1228
          %1230 = vdwg.mxu0
          %1231 = vmatpush.msra.mxu0 %v670
          %1232 = vmatpush.msra.mxu0 %v669
          %1233 = vmatpush.msra.mxu0 %v668
          %1234 = vmatpush.msra.mxu0 %v667
          %1235 = vmatpush.msra.mxu0 %v666
          %1236 = vmatpush.msra.mxu0 %v665
          %1237 = vmatpush.msra.mxu0 %v664
          %1238 = vmatpush.msra.mxu0 %v663
          %1239 = vmatpush.msra.mxu0 %v662
          %1240 = vmatpush.msra.mxu0 %v661
          %1241 = vmatpush.msra.mxu0 %v660
          %1242 = vmatpush.msra.mxu0 %v659
          %1243 = vmatpush.msra.mxu0 %v658
          %1244 = vmatpush.msra.mxu0 %v657
          %1245 = vmatpush.msra.mxu0 %v656
          %1246 = vmatpush.msra.mxu0 %v655
          %1247 = vmatmul.f32.gmra.mxu0 %v457
          %v1248 = vpop.f32.mrf.mxu0
          %v1249 = vadd.f32 %v1229, %v1248
          %1250 = vdwg.mxu0
          %1251 = vmatpush.msra.mxu0 %v686
          %1252 = vmatpush.msra.mxu0 %v685
          %1253 = vmatpush.msra.mxu0 %v684
          %1254 = vmatpush.msra.mxu0 %v683
          %1255 = vmatpush.msra.mxu0 %v682
          %1256 = vmatpush.msra.mxu0 %v681
          %1257 = vmatpush.msra.mxu0 %v680
          %1258 = vmatpush.msra.mxu0 %v679
          %1259 = vmatpush.msra.mxu0 %v678
          %1260 = vmatpush.msra.mxu0 %v677
          %1261 = vmatpush.msra.mxu0 %v676
          %1262 = vmatpush.msra.mxu0 %v675
          %1263 = vmatpush.msra.mxu0 %v674
          %1264 = vmatpush.msra.mxu0 %v673
          %1265 = vmatpush.msra.mxu0 %v672
          %1266 = vmatpush.msra.mxu0 %v671
          %1267 = vmatmul.f32.gmra.mxu0 %v458
          %v1268 = vpop.f32.mrf.mxu0
          %v1269 = vadd.f32 %v1249, %v1268
          %1270 = vdwg.mxu0
          %1271 = vmatpush.msra.mxu0 %v702
          %1272 = vmatpush.msra.mxu0 %v701
          %1273 = vmatpush.msra.mxu0 %v700
          %1274 = vmatpush.msra.mxu0 %v699
          %1275 = vmatpush.msra.mxu0 %v698
          %1276 = vmatpush.msra.mxu0 %v697
          %1277 = vmatpush.msra.mxu0 %v696
          %1278 = vmatpush.msra.mxu0 %v695
          %1279 = vmatpush.msra.mxu0 %v694
          %1280 = vmatpush.msra.mxu0 %v693
          %1281 = vmatpush.msra.mxu0 %v692
          %1282 = vmatpush.msra.mxu0 %v691
          %1283 = vmatpush.msra.mxu0 %v690
          %1284 = vmatpush.msra.mxu0 %v689
          %1285 = vmatpush.msra.mxu0 %v688
          %1286 = vmatpush.msra.mxu0 %v687
          %1287 = vmatmul.f32.gmra.mxu0 %v459
          %v1288 = vpop.f32.mrf.mxu0
          %v1289 = vadd.f32 %v1269, %v1288
          %1290 = vdwg.mxu0
          %1291 = vmatpush.msra.mxu0 %v718
          %1292 = vmatpush.msra.mxu0 %v717
          %1293 = vmatpush.msra.mxu0 %v716
          %1294 = vmatpush.msra.mxu0 %v715
          %1295 = vmatpush.msra.mxu0 %v714
          %1296 = vmatpush.msra.mxu0 %v713
          %1297 = vmatpush.msra.mxu0 %v712
          %1298 = vmatpush.msra.mxu0 %v711
          %1299 = vmatpush.msra.mxu0 %v710
          %1300 = vmatpush.msra.mxu0 %v709
          %1301 = vmatpush.msra.mxu0 %v708
          %1302 = vmatpush.msra.mxu0 %v707
          %1303 = vmatpush.msra.mxu0 %v706
          %1304 = vmatpush.msra.mxu0 %v705
          %1305 = vmatpush.msra.mxu0 %v704
          %1306 = vmatpush.msra.mxu0 %v703
          %1307 = vmatmul.f32.gmra.mxu0 %v460
          %v1308 = vpop.f32.mrf.mxu0
          %v1309 = vadd.f32 %v1289, %v1308
          %1310 = vdwg.mxu0
          %1311 = vmatpush.msra.mxu0 %v734
          %1312 = vmatpush.msra.mxu0 %v733
          %1313 = vmatpush.msra.mxu0 %v732
          %1314 = vmatpush.msra.mxu0 %v731
          %1315 = vmatpush.msra.mxu0 %v730
          %1316 = vmatpush.msra.mxu0 %v729
          %1317 = vmatpush.msra.mxu0 %v728
          %1318 = vmatpush.msra.mxu0 %v727
          %1319 = vmatpush.msra.mxu0 %v726
          %1320 = vmatpush.msra.mxu0 %v725
          %1321 = vmatpush.msra.mxu0 %v724
          %1322 = vmatpush.msra.mxu0 %v723
          %1323 = vmatpush.msra.mxu0 %v722
          %1324 = vmatpush.msra.mxu0 %v721
          %1325 = vmatpush.msra.mxu0 %v720
          %1326 = vmatpush.msra.mxu0 %v719
          %1327 = vmatmul.f32.gmra.mxu0 %v461
          %v1328 = vpop.f32.mrf.mxu0
          %v1329 = vadd.f32 %v1309, %v1328
          %1330 = vdwg.mxu0
          %1331 = vmatpush.msra.mxu0 %v750
          %1332 = vmatpush.msra.mxu0 %v749
          %1333 = vmatpush.msra.mxu0 %v748
          %1334 = vmatpush.msra.mxu0 %v747
          %1335 = vmatpush.msra.mxu0 %v746
          %1336 = vmatpush.msra.mxu0 %v745
          %1337 = vmatpush.msra.mxu0 %v744
          %1338 = vmatpush.msra.mxu0 %v743
          %1339 = vmatpush.msra.mxu0 %v742
          %1340 = vmatpush.msra.mxu0 %v741
          %1341 = vmatpush.msra.mxu0 %v740
          %1342 = vmatpush.msra.mxu0 %v739
          %1343 = vmatpush.msra.mxu0 %v738
          %1344 = vmatpush.msra.mxu0 %v737
          %1345 = vmatpush.msra.mxu0 %v736
          %1346 = vmatpush.msra.mxu0 %v735
          %1347 = vmatmul.f32.gmra.mxu0 %v462
          %v1348 = vpop.f32.mrf.mxu0
          %v1349 = vadd.f32 %v1329, %v1348
          %1350 = vdwg.mxu0
          %1351 = vmatpush.msra.mxu0 %v766
          %1352 = vmatpush.msra.mxu0 %v765
          %1353 = vmatpush.msra.mxu0 %v764
          %1354 = vmatpush.msra.mxu0 %v763
          %1355 = vmatpush.msra.mxu0 %v762
          %1356 = vmatpush.msra.mxu0 %v761
          %1357 = vmatpush.msra.mxu0 %v760
          %1358 = vmatpush.msra.mxu0 %v759
          %1359 = vmatpush.msra.mxu0 %v758
          %1360 = vmatpush.msra.mxu0 %v757
          %1361 = vmatpush.msra.mxu0 %v756
          %1362 = vmatpush.msra.mxu0 %v755
          %1363 = vmatpush.msra.mxu0 %v754
          %1364 = vmatpush.msra.mxu0 %v753
          %1365 = vmatpush.msra.mxu0 %v752
          %1366 = vmatpush.msra.mxu0 %v751
          %1367 = vmatmul.f32.gmra.mxu0 %v463
          %v1368 = vpop.f32.mrf.mxu0
          %v1369 = vadd.f32 %v1349, %v1368
          %1370 = vdwg.mxu0
          %1371 = vmatpush.msra.mxu0 %v782
          %1372 = vmatpush.msra.mxu0 %v781
          %1373 = vmatpush.msra.mxu0 %v780
          %1374 = vmatpush.msra.mxu0 %v779
          %1375 = vmatpush.msra.mxu0 %v778
          %1376 = vmatpush.msra.mxu0 %v777
          %1377 = vmatpush.msra.mxu0 %v776
          %1378 = vmatpush.msra.mxu0 %v775
          %1379 = vmatpush.msra.mxu0 %v774
          %1380 = vmatpush.msra.mxu0 %v773
          %1381 = vmatpush.msra.mxu0 %v772
          %1382 = vmatpush.msra.mxu0 %v771
          %1383 = vmatpush.msra.mxu0 %v770
          %1384 = vmatpush.msra.mxu0 %v769
          %1385 = vmatpush.msra.mxu0 %v768
          %1386 = vmatpush.msra.mxu0 %v767
          %1387 = vmatmul.f32.gmra.mxu0 %v464
          %v1388 = vpop.f32.mrf.mxu0
          %v1389 = vadd.f32 %v1369, %v1388
          %1390 = vdwg.mxu0
          %1391 = vmatpush.msra.mxu0 %v798
          %1392 = vmatpush.msra.mxu0 %v797
          %1393 = vmatpush.msra.mxu0 %v796
          %1394 = vmatpush.msra.mxu0 %v795
          %1395 = vmatpush.msra.mxu0 %v794
          %1396 = vmatpush.msra.mxu0 %v793
          %1397 = vmatpush.msra.mxu0 %v792
          %1398 = vmatpush.msra.mxu0 %v791
          %1399 = vmatpush.msra.mxu0 %v790
          %1400 = vmatpush.msra.mxu0 %v789
          %1401 = vmatpush.msra.mxu0 %v788
          %1402 = vmatpush.msra.mxu0 %v787
          %1403 = vmatpush.msra.mxu0 %v786
          %1404 = vmatpush.msra.mxu0 %v785
          %1405 = vmatpush.msra.mxu0 %v784
          %1406 = vmatpush.msra.mxu0 %v783
          %1407 = vmatmul.f32.gmra.mxu0 %v465
          %v1408 = vpop.f32.mrf.mxu0
          %v1409 = vadd.f32 %v1389, %v1408
          %1410 = vdwg.mxu0
          %1411 = vmatpush.msra.mxu0 %v814
          %1412 = vmatpush.msra.mxu0 %v813
          %1413 = vmatpush.msra.mxu0 %v812
          %1414 = vmatpush.msra.mxu0 %v811
          %1415 = vmatpush.msra.mxu0 %v810
          %1416 = vmatpush.msra.mxu0 %v809
          %1417 = vmatpush.msra.mxu0 %v808
          %1418 = vmatpush.msra.mxu0 %v807
          %1419 = vmatpush.msra.mxu0 %v806
          %1420 = vmatpush.msra.mxu0 %v805
          %1421 = vmatpush.msra.mxu0 %v804
          %1422 = vmatpush.msra.mxu0 %v803
          %1423 = vmatpush.msra.mxu0 %v802
          %1424 = vmatpush.msra.mxu0 %v801
          %1425 = vmatpush.msra.mxu0 %v800
          %1426 = vmatpush.msra.mxu0 %v799
          %1427 = vmatmul.f32.gmra.mxu0 %v466
          %v1428 = vpop.f32.mrf.mxu0
          %v1429 = vadd.f32 %v1409, %v1428
          %1430 = vdwg.mxu0
          %1431 = vmatpush.msra.mxu0 %v830
          %1432 = vmatpush.msra.mxu0 %v829
          %1433 = vmatpush.msra.mxu0 %v828
          %1434 = vmatpush.msra.mxu0 %v827
          %1435 = vmatpush.msra.mxu0 %v826
          %1436 = vmatpush.msra.mxu0 %v825
          %1437 = vmatpush.msra.mxu0 %v824
          %1438 = vmatpush.msra.mxu0 %v823
          %1439 = vmatpush.msra.mxu0 %v822
          %1440 = vmatpush.msra.mxu0 %v821
          %1441 = vmatpush.msra.mxu0 %v820
          %1442 = vmatpush.msra.mxu0 %v819
          %1443 = vmatpush.msra.mxu0 %v818
          %1444 = vmatpush.msra.mxu0 %v817
          %1445 = vmatpush.msra.mxu0 %v816
          %1446 = vmatpush.msra.mxu0 %v815
          %1447 = vmatmul.f32.gmra.mxu0 %v467
          %v1448 = vpop.f32.mrf.mxu0
          %v1449 = vadd.f32 %v1429, %v1448
          %1450 = vdwg.mxu0
          %1451 = vmatpush.msra.mxu0 %v846
          %1452 = vmatpush.msra.mxu0 %v845
          %1453 = vmatpush.msra.mxu0 %v844
          %1454 = vmatpush.msra.mxu0 %v843
          %1455 = vmatpush.msra.mxu0 %v842
          %1456 = vmatpush.msra.mxu0 %v841
          %1457 = vmatpush.msra.mxu0 %v840
          %1458 = vmatpush.msra.mxu0 %v839
          %1459 = vmatpush.msra.mxu0 %v838
          %1460 = vmatpush.msra.mxu0 %v837
          %1461 = vmatpush.msra.mxu0 %v836
          %1462 = vmatpush.msra.mxu0 %v835
          %1463 = vmatpush.msra.mxu0 %v834
          %1464 = vmatpush.msra.mxu0 %v833
          %1465 = vmatpush.msra.mxu0 %v832
          %1466 = vmatpush.msra.mxu0 %v831
          %1467 = vmatmul.f32.gmra.mxu0 %v468
          %v1468 = vpop.f32.mrf.mxu0
          %v1469 = vadd.f32 %v1449, %v1468
          %1470 = vdwg.mxu0
          %1471 = vmatpush.msra.mxu0 %v862
          %1472 = vmatpush.msra.mxu0 %v861
          %1473 = vmatpush.msra.mxu0 %v860
          %1474 = vmatpush.msra.mxu0 %v859
          %1475 = vmatpush.msra.mxu0 %v858
          %1476 = vmatpush.msra.mxu0 %v857
          %1477 = vmatpush.msra.mxu0 %v856
          %1478 = vmatpush.msra.mxu0 %v855
          %1479 = vmatpush.msra.mxu0 %v854
          %1480 = vmatpush.msra.mxu0 %v853
          %1481 = vmatpush.msra.mxu0 %v852
          %1482 = vmatpush.msra.mxu0 %v851
          %1483 = vmatpush.msra.mxu0 %v850
          %1484 = vmatpush.msra.mxu0 %v849
          %1485 = vmatpush.msra.mxu0 %v848
          %1486 = vmatpush.msra.mxu0 %v847
          %1487 = vmatmul.f32.gmra.mxu0 %v469
          %v1488 = vpop.f32.mrf.mxu0
          %v1489 = vadd.f32 %v1469, %v1488
          %1490 = vdwg.mxu0
          %1491 = vmatpush.msra.mxu0 %v878
          %1492 = vmatpush.msra.mxu0 %v877
          %1493 = vmatpush.msra.mxu0 %v876
          %1494 = vmatpush.msra.mxu0 %v875
          %1495 = vmatpush.msra.mxu0 %v874
          %1496 = vmatpush.msra.mxu0 %v873
          %1497 = vmatpush.msra.mxu0 %v872
          %1498 = vmatpush.msra.mxu0 %v871
          %1499 = vmatpush.msra.mxu0 %v870
          %1500 = vmatpush.msra.mxu0 %v869
          %1501 = vmatpush.msra.mxu0 %v868
          %1502 = vmatpush.msra.mxu0 %v867
          %1503 = vmatpush.msra.mxu0 %v866
          %1504 = vmatpush.msra.mxu0 %v865
          %1505 = vmatpush.msra.mxu0 %v864
          %1506 = vmatpush.msra.mxu0 %v863
          %1507 = vmatmul.f32.gmra.mxu0 %v470
          %v1508 = vpop.f32.mrf.mxu0
          %v1509 = vadd.f32 %v1489, %v1508
          %1510 = vdwg.mxu0
          %1511 = vmatpush.msra.mxu0 %v894
          %1512 = vmatpush.msra.mxu0 %v893
          %1513 = vmatpush.msra.mxu0 %v892
          %1514 = vmatpush.msra.mxu0 %v891
          %1515 = vmatpush.msra.mxu0 %v890
          %1516 = vmatpush.msra.mxu0 %v889
          %1517 = vmatpush.msra.mxu0 %v888
          %1518 = vmatpush.msra.mxu0 %v887
          %1519 = vmatpush.msra.mxu0 %v886
          %1520 = vmatpush.msra.mxu0 %v885
          %1521 = vmatpush.msra.mxu0 %v884
          %1522 = vmatpush.msra.mxu0 %v883
          %1523 = vmatpush.msra.mxu0 %v882
          %1524 = vmatpush.msra.mxu0 %v881
          %1525 = vmatpush.msra.mxu0 %v880
          %1526 = vmatpush.msra.mxu0 %v879
          %1527 = vmatmul.f32.gmra.mxu0 %v471
          %v1528 = vpop.f32.mrf.mxu0
          %v1529 = vadd.f32 %v1509, %v1528
          %1530 = vdwg.mxu0
          %1531 = vmatpush.msra.mxu0 %v910
          %1532 = vmatpush.msra.mxu0 %v909
          %1533 = vmatpush.msra.mxu0 %v908
          %1534 = vmatpush.msra.mxu0 %v907
          %1535 = vmatpush.msra.mxu0 %v906
          %1536 = vmatpush.msra.mxu0 %v905
          %1537 = vmatpush.msra.mxu0 %v904
          %1538 = vmatpush.msra.mxu0 %v903
          %1539 = vmatpush.msra.mxu0 %v902
          %1540 = vmatpush.msra.mxu0 %v901
          %1541 = vmatpush.msra.mxu0 %v900
          %1542 = vmatpush.msra.mxu0 %v899
          %1543 = vmatpush.msra.mxu0 %v898
          %1544 = vmatpush.msra.mxu0 %v897
          %1545 = vmatpush.msra.mxu0 %v896
          %1546 = vmatpush.msra.mxu0 %v895
          %1547 = vmatmul.f32.gmra.mxu0 %v472
          %v1548 = vpop.f32.mrf.mxu0
          %v1549 = vadd.f32 %v1529, %v1548
          %1550 = vdwg.mxu0
          %1551 = vmatpush.msra.mxu0 %v926
          %1552 = vmatpush.msra.mxu0 %v925
          %1553 = vmatpush.msra.mxu0 %v924
          %1554 = vmatpush.msra.mxu0 %v923
          %1555 = vmatpush.msra.mxu0 %v922
          %1556 = vmatpush.msra.mxu0 %v921
          %1557 = vmatpush.msra.mxu0 %v920
          %1558 = vmatpush.msra.mxu0 %v919
          %1559 = vmatpush.msra.mxu0 %v918
          %1560 = vmatpush.msra.mxu0 %v917
          %1561 = vmatpush.msra.mxu0 %v916
          %1562 = vmatpush.msra.mxu0 %v915
          %1563 = vmatpush.msra.mxu0 %v914
          %1564 = vmatpush.msra.mxu0 %v913
          %1565 = vmatpush.msra.mxu0 %v912
          %1566 = vmatpush.msra.mxu0 %v911
          %1567 = vmatmul.f32.gmra.mxu0 %v473
          %v1568 = vpop.f32.mrf.mxu0
          %v1569 = vadd.f32 %v1549, %v1568
          %1570 = vdwg.mxu0
          %1571 = vmatpush.msra.mxu0 %v942
          %1572 = vmatpush.msra.mxu0 %v941
          %1573 = vmatpush.msra.mxu0 %v940
          %1574 = vmatpush.msra.mxu0 %v939
          %1575 = vmatpush.msra.mxu0 %v938
          %1576 = vmatpush.msra.mxu0 %v937
          %1577 = vmatpush.msra.mxu0 %v936
          %1578 = vmatpush.msra.mxu0 %v935
          %1579 = vmatpush.msra.mxu0 %v934
          %1580 = vmatpush.msra.mxu0 %v933
          %1581 = vmatpush.msra.mxu0 %v932
          %1582 = vmatpush.msra.mxu0 %v931
          %1583 = vmatpush.msra.mxu0 %v930
          %1584 = vmatpush.msra.mxu0 %v929
          %1585 = vmatpush.msra.mxu0 %v928
          %1586 = vmatpush.msra.mxu0 %v927
          %1587 = vmatmul.f32.gmra.mxu0 %v474
          %v1588 = vpop.f32.mrf.mxu0
          %v1589 = vadd.f32 %v1569, %v1588
          %1590 = vdwg.mxu0
          %1591 = vmatpush.msra.mxu0 %v958
          %1592 = vmatpush.msra.mxu0 %v957
          %1593 = vmatpush.msra.mxu0 %v956
          %1594 = vmatpush.msra.mxu0 %v955
          %1595 = vmatpush.msra.mxu0 %v954
          %1596 = vmatpush.msra.mxu0 %v953
          %1597 = vmatpush.msra.mxu0 %v952
          %1598 = vmatpush.msra.mxu0 %v951
          %1599 = vmatpush.msra.mxu0 %v950
          %1600 = vmatpush.msra.mxu0 %v949
          %1601 = vmatpush.msra.mxu0 %v948
          %1602 = vmatpush.msra.mxu0 %v947
          %1603 = vmatpush.msra.mxu0 %v946
          %1604 = vmatpush.msra.mxu0 %v945
          %1605 = vmatpush.msra.mxu0 %v944
          %1606 = vmatpush.msra.mxu0 %v943
          %1607 = vmatmul.f32.gmra.mxu0 %v475
          %v1608 = vpop.f32.mrf.mxu0
          %v1609 = vadd.f32 %v1589, %v1608
          %1610 = vdwg.mxu0
          %1611 = vmatpush.msra.mxu0 %v974
          %1612 = vmatpush.msra.mxu0 %v973
          %1613 = vmatpush.msra.mxu0 %v972
          %1614 = vmatpush.msra.mxu0 %v971
          %1615 = vmatpush.msra.mxu0 %v970
          %1616 = vmatpush.msra.mxu0 %v969
          %1617 = vmatpush.msra.mxu0 %v968
          %1618 = vmatpush.msra.mxu0 %v967
          %1619 = vmatpush.msra.mxu0 %v966
          %1620 = vmatpush.msra.mxu0 %v965
          %1621 = vmatpush.msra.mxu0 %v964
          %1622 = vmatpush.msra.mxu0 %v963
          %1623 = vmatpush.msra.mxu0 %v962
          %1624 = vmatpush.msra.mxu0 %v961
          %1625 = vmatpush.msra.mxu0 %v960
          %1626 = vmatpush.msra.mxu0 %v959
          %1627 = vmatmul.f32.gmra.mxu0 %v476
          %v1628 = vpop.f32.mrf.mxu0
          %v1629 = vadd.f32 %v1609, %v1628
          %1630 = vdwg.mxu0
          %1631 = vmatpush.msra.mxu0 %v990
          %1632 = vmatpush.msra.mxu0 %v989
          %1633 = vmatpush.msra.mxu0 %v988
          %1634 = vmatpush.msra.mxu0 %v987
          %1635 = vmatpush.msra.mxu0 %v986
          %1636 = vmatpush.msra.mxu0 %v985
          %1637 = vmatpush.msra.mxu0 %v984
          %1638 = vmatpush.msra.mxu0 %v983
          %1639 = vmatpush.msra.mxu0 %v982
          %1640 = vmatpush.msra.mxu0 %v981
          %1641 = vmatpush.msra.mxu0 %v980
          %1642 = vmatpush.msra.mxu0 %v979
          %1643 = vmatpush.msra.mxu0 %v978
          %1644 = vmatpush.msra.mxu0 %v977
          %1645 = vmatpush.msra.mxu0 %v976
          %1646 = vmatpush.msra.mxu0 %v975
          %1647 = vmatmul.f32.gmra.mxu0 %v477
          %v1648 = vpop.f32.mrf.mxu0
          %v1649 = vadd.f32 %v1629, %v1648
          %1650 = vdwg.mxu0
          %1651 = vmatpush.msra.mxu0 %v1006
          %1652 = vmatpush.msra.mxu0 %v1005
          %1653 = vmatpush.msra.mxu0 %v1004
          %1654 = vmatpush.msra.mxu0 %v1003
          %1655 = vmatpush.msra.mxu0 %v1002
          %1656 = vmatpush.msra.mxu0 %v1001
          %1657 = vmatpush.msra.mxu0 %v1000
          %1658 = vmatpush.msra.mxu0 %v999
          %1659 = vmatpush.msra.mxu0 %v998
          %1660 = vmatpush.msra.mxu0 %v997
          %1661 = vmatpush.msra.mxu0 %v996
          %1662 = vmatpush.msra.mxu0 %v995
          %1663 = vmatpush.msra.mxu0 %v994
          %1664 = vmatpush.msra.mxu0 %v993
          %1665 = vmatpush.msra.mxu0 %v992
          %1666 = vmatpush.msra.mxu0 %v991
          %1667 = vmatmul.f32.gmra.mxu0 %v478
          %v1668 = vpop.f32.mrf.mxu0
          %v1669 = vadd.f32 %v1649, %v1668
          %1670 = vdwg.mxu0
          %v1671 = vmax.f32 %v1669, 0.0
          %v1672 = vld [vmem:[#allocation7] sm:$0xff]
          %v1673 = vld [vmem:[#allocation7 + $0x8] sm:$0xff]
          %v1674 = vld [vmem:[#allocation7 + $0x10] sm:$0xff]
          %v1675 = vld [vmem:[#allocation7 + $0x18] sm:$0xff]
          %v1676 = vld [vmem:[#allocation7 + $0x20] sm:$0xff]
          %v1677 = vld [vmem:[#allocation7 + $0x28] sm:$0xff]
          %v1678 = vld [vmem:[#allocation7 + $0x30] sm:$0xff]
          %v1679 = vld [vmem:[#allocation7 + $0x38] sm:$0xff]
          %v1680 = vld [vmem:[#allocation7 + $0x40] sm:$0xff]
          %v1681 = vld [vmem:[#allocation7 + $0x48] sm:$0xff]
          %v1682 = vld [vmem:[#allocation7 + $0x50] sm:$0xff]
          %v1683 = vld [vmem:[#allocation7 + $0x58] sm:$0xff]
          %v1684 = vld [vmem:[#allocation7 + $0x60] sm:$0xff]
          %v1685 = vld [vmem:[#allocation7 + $0x68] sm:$0xff]
          %v1686 = vld [vmem:[#allocation7 + $0x70] sm:$0xff]
          %v1687 = vld [vmem:[#allocation7 + $0x78] sm:$0xff]
          %v1688 = vld [vmem:[#allocation8] sm:$0x1]
          %v1690 = vperm.slane %v1688, 0
          %1692 = vmatpush.msra.mxu0 %v1687
          %1693 = vmatpush.msra.mxu0 %v1686
          %1694 = vmatpush.msra.mxu0 %v1685
          %1695 = vmatpush.msra.mxu0 %v1684
          %1696 = vmatpush.msra.mxu0 %v1683
          %1697 = vmatpush.msra.mxu0 %v1682
          %1698 = vmatpush.msra.mxu0 %v1681
          %1699 = vmatpush.msra.mxu0 %v1680
          %1700 = vmatpush.msra.mxu0 %v1679
          %1701 = vmatpush.msra.mxu0 %v1678
          %1702 = vmatpush.msra.mxu0 %v1677
          %1703 = vmatpush.msra.mxu0 %v1676
          %1704 = vmatpush.msra.mxu0 %v1675
          %1705 = vmatpush.msra.mxu0 %v1674
          %1706 = vmatpush.msra.mxu0 %v1673
          %1707 = vmatpush.msra.mxu0 %v1672
          %1708 = vmatmul.f32.gmra.mxu0 %v1671
          %v1709 = vpop.f32.mrf.mxu0
          %v1710 = vadd.f32 %v1690, %v1709
          %1711 = vdwg.mxu0
          %v1712 = vmax.f32 %v1710, 0.0
          %1713 = vst [vmem:[#allocation2] sm:$0xff] %v1712
        $region76: #{chess_qnetwork_naive_forward.1} parent=47 // pred_fallthru
          _
        %v1714 = vld [vmem:[#allocation2] sm:$0xff]
        %v1715 = vld [vmem:[%s369] sm:$0xff]
        %v1716 = vld [vmem:[%s369 + $0x8] sm:$0xff]
        %v1717 = vld [vmem:[%s369 + $0x10] sm:$0xff]
        %v1718 = vld [vmem:[%s369 + $0x18] sm:$0xff]
        %v1719 = vld [vmem:[%s369 + $0x20] sm:$0xff]
        %v1720 = vld [vmem:[%s369 + $0x28] sm:$0xff]
        %v1721 = vld [vmem:[%s369 + $0x30] sm:$0xff]
        %v1722 = vld [vmem:[%s369 + $0x38] sm:$0xff]
        %v1723 = vld [vmem:[%s369 + $0x40] sm:$0xff]
        %v1724 = vld [vmem:[%s369 + $0x48] sm:$0xff]
        %v1725 = vld [vmem:[%s369 + $0x50] sm:$0xff]
        %v1726 = vld [vmem:[%s369 + $0x58] sm:$0xff]
        %v1727 = vld [vmem:[%s369 + $0x60] sm:$0xff]
        %v1728 = vld [vmem:[%s369 + $0x68] sm:$0xff]
        %v1729 = vld [vmem:[%s369 + $0x70] sm:$0xff]
        %v1730 = vld [vmem:[%s369 + $0x78] sm:$0xff]
        %v1731 = vld [vmem:[%s369 + $0x80] sm:$0xff]
        %v1732 = vld [vmem:[%s369 + $0x88] sm:$0xff]
        %v1733 = vld [vmem:[%s369 + $0x90] sm:$0xff]
        %v1734 = vld [vmem:[%s369 + $0x98] sm:$0xff]
        %v1735 = vld [vmem:[%s369 + $0xa0] sm:$0xff]
        %v1736 = vld [vmem:[%s369 + $0xa8] sm:$0xff]
        %v1737 = vld [vmem:[%s369 + $0xb0] sm:$0xff]
        %v1738 = vld [vmem:[%s369 + $0xb8] sm:$0xff]
        %v1739 = vld [vmem:[%s369 + $0xc0] sm:$0xff]
        %v1740 = vld [vmem:[%s369 + $0xc8] sm:$0xff]
        %v1741 = vld [vmem:[%s369 + $0xd0] sm:$0xff]
        %v1742 = vld [vmem:[%s369 + $0xd8] sm:$0xff]
        %v1743 = vld [vmem:[%s369 + $0xe0] sm:$0xff]
        %v1744 = vld [vmem:[%s369 + $0xe8] sm:$0xff]
        %v1745 = vld [vmem:[%s369 + $0xf0] sm:$0xff]
        %v1746 = vld [vmem:[%s369 + $0xf8] sm:$0xff]
        %v1747 = vld [vmem:[%s369 + $0x100] sm:$0xff]
        %v1748 = vld [vmem:[%s369 + $0x108] sm:$0xff]
        %v1749 = vld [vmem:[%s369 + $0x110] sm:$0xff]
        %v1750 = vld [vmem:[%s369 + $0x118] sm:$0xff]
        %v1751 = vld [vmem:[%s369 + $0x120] sm:$0xff]
        %v1752 = vld [vmem:[%s369 + $0x128] sm:$0xff]
        %v1753 = vld [vmem:[%s369 + $0x130] sm:$0xff]
        %v1754 = vld [vmem:[%s369 + $0x138] sm:$0xff]
        %v1755 = vld [vmem:[%s369 + $0x140] sm:$0xff]
        %v1756 = vld [vmem:[%s369 + $0x148] sm:$0xff]
        %v1757 = vld [vmem:[%s369 + $0x150] sm:$0xff]
        %v1758 = vld [vmem:[%s369 + $0x158] sm:$0xff]
        %v1759 = vld [vmem:[%s369 + $0x160] sm:$0xff]
        %v1760 = vld [vmem:[%s369 + $0x168] sm:$0xff]
        %v1761 = vld [vmem:[%s369 + $0x170] sm:$0xff]
        %v1762 = vld [vmem:[%s369 + $0x178] sm:$0xff]
        %v1763 = vld [vmem:[%s369 + $0x180] sm:$0xff]
        %v1764 = vld [vmem:[%s369 + $0x188] sm:$0xff]
        %v1765 = vld [vmem:[%s369 + $0x190] sm:$0xff]
        %v1766 = vld [vmem:[%s369 + $0x198] sm:$0xff]
        %v1767 = vld [vmem:[%s369 + $0x1a0] sm:$0xff]
        %v1768 = vld [vmem:[%s369 + $0x1a8] sm:$0xff]
        %v1769 = vld [vmem:[%s369 + $0x1b0] sm:$0xff]
        %v1770 = vld [vmem:[%s369 + $0x1b8] sm:$0xff]
        %v1771 = vld [vmem:[%s369 + $0x1c0] sm:$0xff]
        %v1772 = vld [vmem:[%s369 + $0x1c8] sm:$0xff]
        %v1773 = vld [vmem:[%s369 + $0x1d0] sm:$0xff]
        %v1774 = vld [vmem:[%s369 + $0x1d8] sm:$0xff]
        %v1775 = vld [vmem:[%s369 + $0x1e0] sm:$0xff]
        %v1776 = vld [vmem:[%s369 + $0x1e8] sm:$0xff]
        %v1777 = vld [vmem:[%s369 + $0x1f0] sm:$0xff]
        %v1778 = vld [vmem:[%s369 + $0x1f8] sm:$0xff]
        %v1779 = vld [vmem:[%s369 + $0x200] sm:$0xff]
        %v1780 = vld [vmem:[%s369 + $0x208] sm:$0xff]
        %v1781 = vld [vmem:[%s369 + $0x210] sm:$0xff]
        %v1782 = vld [vmem:[%s369 + $0x218] sm:$0xff]
        %v1783 = vld [vmem:[%s369 + $0x220] sm:$0xff]
        %v1784 = vld [vmem:[%s369 + $0x228] sm:$0xff]
        %v1785 = vld [vmem:[%s369 + $0x230] sm:$0xff]
        %v1786 = vld [vmem:[%s369 + $0x238] sm:$0xff]
        %v1787 = vld [vmem:[%s369 + $0x240] sm:$0xff]
        %v1788 = vld [vmem:[%s369 + $0x248] sm:$0xff]
        %v1789 = vld [vmem:[%s369 + $0x250] sm:$0xff]
        %v1790 = vld [vmem:[%s369 + $0x258] sm:$0xff]
        %v1791 = vld [vmem:[%s369 + $0x260] sm:$0xff]
        %v1792 = vld [vmem:[%s369 + $0x268] sm:$0xff]
        %v1793 = vld [vmem:[%s369 + $0x270] sm:$0xff]
        %v1794 = vld [vmem:[%s369 + $0x278] sm:$0xff]
        %v1795 = vld [vmem:[%s369 + $0x280] sm:$0xff]
        %v1796 = vld [vmem:[%s369 + $0x288] sm:$0xff]
        %v1797 = vld [vmem:[%s369 + $0x290] sm:$0xff]
        %v1798 = vld [vmem:[%s369 + $0x298] sm:$0xff]
        %v1799 = vld [vmem:[%s369 + $0x2a0] sm:$0xff]
        %v1800 = vld [vmem:[%s369 + $0x2a8] sm:$0xff]
        %v1801 = vld [vmem:[%s369 + $0x2b0] sm:$0xff]
        %v1802 = vld [vmem:[%s369 + $0x2b8] sm:$0xff]
        %v1803 = vld [vmem:[%s369 + $0x2c0] sm:$0xff]
        %v1804 = vld [vmem:[%s369 + $0x2c8] sm:$0xff]
        %v1805 = vld [vmem:[%s369 + $0x2d0] sm:$0xff]
        %v1806 = vld [vmem:[%s369 + $0x2d8] sm:$0xff]
        %v1807 = vld [vmem:[%s369 + $0x2e0] sm:$0xff]
        %v1808 = vld [vmem:[%s369 + $0x2e8] sm:$0xff]
        %v1809 = vld [vmem:[%s369 + $0x2f0] sm:$0xff]
        %v1810 = vld [vmem:[%s369 + $0x2f8] sm:$0xff]
        %v1811 = vld [vmem:[%s369 + $0x300] sm:$0xff]
        %v1812 = vld [vmem:[%s369 + $0x308] sm:$0xff]
        %v1813 = vld [vmem:[%s369 + $0x310] sm:$0xff]
        %v1814 = vld [vmem:[%s369 + $0x318] sm:$0xff]
        %v1815 = vld [vmem:[%s369 + $0x320] sm:$0xff]
        %v1816 = vld [vmem:[%s369 + $0x328] sm:$0xff]
        %v1817 = vld [vmem:[%s369 + $0x330] sm:$0xff]
        %v1818 = vld [vmem:[%s369 + $0x338] sm:$0xff]
        %v1819 = vld [vmem:[%s369 + $0x340] sm:$0xff]
        %v1820 = vld [vmem:[%s369 + $0x348] sm:$0xff]
        %v1821 = vld [vmem:[%s369 + $0x350] sm:$0xff]
        %v1822 = vld [vmem:[%s369 + $0x358] sm:$0xff]
        %v1823 = vld [vmem:[%s369 + $0x360] sm:$0xff]
        %v1824 = vld [vmem:[%s369 + $0x368] sm:$0xff]
        %v1825 = vld [vmem:[%s369 + $0x370] sm:$0xff]
        %v1826 = vld [vmem:[%s369 + $0x378] sm:$0xff]
        %v1827 = vld [vmem:[%s369 + $0x380] sm:$0xff]
        %v1828 = vld [vmem:[%s369 + $0x388] sm:$0xff]
        %v1829 = vld [vmem:[%s369 + $0x390] sm:$0xff]
        %v1830 = vld [vmem:[%s369 + $0x398] sm:$0xff]
        %v1831 = vld [vmem:[%s369 + $0x3a0] sm:$0xff]
        %v1832 = vld [vmem:[%s369 + $0x3a8] sm:$0xff]
        %v1833 = vld [vmem:[%s369 + $0x3b0] sm:$0xff]
        %v1834 = vld [vmem:[%s369 + $0x3b8] sm:$0xff]
        %v1835 = vld [vmem:[%s369 + $0x3c0] sm:$0xff]
        %v1836 = vld [vmem:[%s369 + $0x3c8] sm:$0xff]
        %v1837 = vld [vmem:[%s369 + $0x3d0] sm:$0xff]
        %v1838 = vld [vmem:[%s369 + $0x3d8] sm:$0xff]
        %v1839 = vld [vmem:[%s369 + $0x3e0] sm:$0xff]
        %v1840 = vld [vmem:[%s369 + $0x3e8] sm:$0xff]
        %v1841 = vld [vmem:[%s369 + $0x3f0] sm:$0xff]
        %v1842 = vld [vmem:[%s369 + $0x3f8] sm:$0xff]
        %v1843 = vld [vmem:[%s369 + $0x400] sm:$0xff]
        %v1844 = vld [vmem:[%s369 + $0x408] sm:$0xff]
        %v1845 = vld [vmem:[%s369 + $0x410] sm:$0xff]
        %v1846 = vld [vmem:[%s369 + $0x418] sm:$0xff]
        %v1847 = vld [vmem:[%s369 + $0x420] sm:$0xff]
        %v1848 = vld [vmem:[%s369 + $0x428] sm:$0xff]
        %v1849 = vld [vmem:[%s369 + $0x430] sm:$0xff]
        %v1850 = vld [vmem:[%s369 + $0x438] sm:$0xff]
        %v1851 = vld [vmem:[%s369 + $0x440] sm:$0xff]
        %v1852 = vld [vmem:[%s369 + $0x448] sm:$0xff]
        %v1853 = vld [vmem:[%s369 + $0x450] sm:$0xff]
        %v1854 = vld [vmem:[%s369 + $0x458] sm:$0xff]
        %v1855 = vld [vmem:[%s369 + $0x460] sm:$0xff]
        %v1856 = vld [vmem:[%s369 + $0x468] sm:$0xff]
        %v1857 = vld [vmem:[%s369 + $0x470] sm:$0xff]
        %v1858 = vld [vmem:[%s369 + $0x478] sm:$0xff]
        %v1859 = vld [vmem:[%s369 + $0x480] sm:$0xff]
        %v1860 = vld [vmem:[%s369 + $0x488] sm:$0xff]
        %v1861 = vld [vmem:[%s369 + $0x490] sm:$0xff]
        %v1862 = vld [vmem:[%s369 + $0x498] sm:$0xff]
        %v1863 = vld [vmem:[%s369 + $0x4a0] sm:$0xff]
        %v1864 = vld [vmem:[%s369 + $0x4a8] sm:$0xff]
        %v1865 = vld [vmem:[%s369 + $0x4b0] sm:$0xff]
        %v1866 = vld [vmem:[%s369 + $0x4b8] sm:$0xff]
        %v1867 = vld [vmem:[%s369 + $0x4c0] sm:$0xff]
        %v1868 = vld [vmem:[%s369 + $0x4c8] sm:$0xff]
        %v1869 = vld [vmem:[%s369 + $0x4d0] sm:$0xff]
        %v1870 = vld [vmem:[%s369 + $0x4d8] sm:$0xff]
        %v1871 = vld [vmem:[%s369 + $0x4e0] sm:$0xff]
        %v1872 = vld [vmem:[%s369 + $0x4e8] sm:$0xff]
        %v1873 = vld [vmem:[%s369 + $0x4f0] sm:$0xff]
        %v1874 = vld [vmem:[%s369 + $0x4f8] sm:$0xff]
        %v1875 = vld [vmem:[%s369 + $0x500] sm:$0xff]
        %v1876 = vld [vmem:[%s369 + $0x508] sm:$0xff]
        %v1877 = vld [vmem:[%s369 + $0x510] sm:$0xff]
        %v1878 = vld [vmem:[%s369 + $0x518] sm:$0xff]
        %v1879 = vld [vmem:[%s369 + $0x520] sm:$0xff]
        %v1880 = vld [vmem:[%s369 + $0x528] sm:$0xff]
        %v1881 = vld [vmem:[%s369 + $0x530] sm:$0xff]
        %v1882 = vld [vmem:[%s369 + $0x538] sm:$0xff]
        %v1883 = vld [vmem:[%s369 + $0x540] sm:$0xff]
        %v1884 = vld [vmem:[%s369 + $0x548] sm:$0xff]
        %v1885 = vld [vmem:[%s369 + $0x550] sm:$0xff]
        %v1886 = vld [vmem:[%s369 + $0x558] sm:$0xff]
        %v1887 = vld [vmem:[%s369 + $0x560] sm:$0xff]
        %v1888 = vld [vmem:[%s369 + $0x568] sm:$0xff]
        %v1889 = vld [vmem:[%s369 + $0x570] sm:$0xff]
        %v1890 = vld [vmem:[%s369 + $0x578] sm:$0xff]
        %v1891 = vld [vmem:[%s379] sm:$0xff]
        %v1892 = vld [vmem:[%s379 + $0x8] sm:$0x7]
        %v1895 = vperm.slane %v1891, 0
        %v1896 = vperm.slane %v1891, 1
        %v1897 = vperm.slane %v1891, 2
        %v1898 = vperm.slane %v1891, 3
        %v1899 = vperm.slane %v1891, 4
        %v1900 = vperm.slane %v1891, 5
        %v1901 = vperm.slane %v1891, 6
        %v1902 = vperm.slane %v1891, 7
        %v1903 = vperm.slane %v1892, 0
        %v1904 = vperm.slane %v1892, 1
        %v1905 = vperm.slane %v1892, 2
        %1917 = vmatpush.msra.mxu0 %v1880
        %1918 = vmatpush.msra.mxu0 %v1869
        %1919 = vmatpush.msra.mxu0 %v1858
        %1920 = vmatpush.msra.mxu0 %v1847
        %1921 = vmatpush.msra.mxu0 %v1836
        %1922 = vmatpush.msra.mxu0 %v1825
        %1923 = vmatpush.msra.mxu0 %v1814
        %1924 = vmatpush.msra.mxu0 %v1803
        %1925 = vmatpush.msra.mxu0 %v1792
        %1926 = vmatpush.msra.mxu0 %v1781
        %1927 = vmatpush.msra.mxu0 %v1770
        %1928 = vmatpush.msra.mxu0 %v1759
        %1929 = vmatpush.msra.mxu0 %v1748
        %1930 = vmatpush.msra.mxu0 %v1737
        %1931 = vmatpush.msra.mxu0 %v1726
        %1932 = vmatpush.msra.mxu0 %v1715
        %1933 = vmatmul.f32.gmra.mxu0 %v1714
        %v1934 = vpop.f32.mrf.mxu0
        %v1935 = vadd.f32 %v1895, %v1934
        %1936 = vdwg.mxu0
        %1937 = vmatpush.msra.mxu0 %v1881
        %1938 = vmatpush.msra.mxu0 %v1870
        %1939 = vmatpush.msra.mxu0 %v1859
        %1940 = vmatpush.msra.mxu0 %v1848
        %1941 = vmatpush.msra.mxu0 %v1837
        %1942 = vmatpush.msra.mxu0 %v1826
        %1943 = vmatpush.msra.mxu0 %v1815
        %1944 = vmatpush.msra.mxu0 %v1804
        %1945 = vmatpush.msra.mxu0 %v1793
        %1946 = vmatpush.msra.mxu0 %v1782
        %1947 = vmatpush.msra.mxu0 %v1771
        %1948 = vmatpush.msra.mxu0 %v1760
        %1949 = vmatpush.msra.mxu0 %v1749
        %1950 = vmatpush.msra.mxu0 %v1738
        %1951 = vmatpush.msra.mxu0 %v1727
        %1952 = vmatpush.msra.mxu0 %v1716
        %1953 = vmatmul.f32.gmra.mxu0 %v1714
        %v1954 = vpop.f32.mrf.mxu0
        %v1955 = vadd.f32 %v1896, %v1954
        %1956 = vdwg.mxu0
        %1957 = vmatpush.msra.mxu0 %v1882
        %1958 = vmatpush.msra.mxu0 %v1871
        %1959 = vmatpush.msra.mxu0 %v1860
        %1960 = vmatpush.msra.mxu0 %v1849
        %1961 = vmatpush.msra.mxu0 %v1838
        %1962 = vmatpush.msra.mxu0 %v1827
        %1963 = vmatpush.msra.mxu0 %v1816
        %1964 = vmatpush.msra.mxu0 %v1805
        %1965 = vmatpush.msra.mxu0 %v1794
        %1966 = vmatpush.msra.mxu0 %v1783
        %1967 = vmatpush.msra.mxu0 %v1772
        %1968 = vmatpush.msra.mxu0 %v1761
        %1969 = vmatpush.msra.mxu0 %v1750
        %1970 = vmatpush.msra.mxu0 %v1739
        %1971 = vmatpush.msra.mxu0 %v1728
        %1972 = vmatpush.msra.mxu0 %v1717
        %1973 = vmatmul.f32.gmra.mxu0 %v1714
        %v1974 = vpop.f32.mrf.mxu0
        %v1975 = vadd.f32 %v1897, %v1974
        %1976 = vdwg.mxu0
        %1977 = vmatpush.msra.mxu0 %v1883
        %1978 = vmatpush.msra.mxu0 %v1872
        %1979 = vmatpush.msra.mxu0 %v1861
        %1980 = vmatpush.msra.mxu0 %v1850
        %1981 = vmatpush.msra.mxu0 %v1839
        %1982 = vmatpush.msra.mxu0 %v1828
        %1983 = vmatpush.msra.mxu0 %v1817
        %1984 = vmatpush.msra.mxu0 %v1806
        %1985 = vmatpush.msra.mxu0 %v1795
        %1986 = vmatpush.msra.mxu0 %v1784
        %1987 = vmatpush.msra.mxu0 %v1773
        %1988 = vmatpush.msra.mxu0 %v1762
        %1989 = vmatpush.msra.mxu0 %v1751
        %1990 = vmatpush.msra.mxu0 %v1740
        %1991 = vmatpush.msra.mxu0 %v1729
        %1992 = vmatpush.msra.mxu0 %v1718
        %1993 = vmatmul.f32.gmra.mxu0 %v1714
        %v1994 = vpop.f32.mrf.mxu0
        %v1995 = vadd.f32 %v1898, %v1994
        %1996 = vdwg.mxu0
        %1997 = vmatpush.msra.mxu0 %v1884
        %1998 = vmatpush.msra.mxu0 %v1873
        %1999 = vmatpush.msra.mxu0 %v1862
        %2000 = vmatpush.msra.mxu0 %v1851
        %2001 = vmatpush.msra.mxu0 %v1840
        %2002 = vmatpush.msra.mxu0 %v1829
        %2003 = vmatpush.msra.mxu0 %v1818
        %2004 = vmatpush.msra.mxu0 %v1807
        %2005 = vmatpush.msra.mxu0 %v1796
        %2006 = vmatpush.msra.mxu0 %v1785
        %2007 = vmatpush.msra.mxu0 %v1774
        %2008 = vmatpush.msra.mxu0 %v1763
        %2009 = vmatpush.msra.mxu0 %v1752
        %2010 = vmatpush.msra.mxu0 %v1741
        %2011 = vmatpush.msra.mxu0 %v1730
        %2012 = vmatpush.msra.mxu0 %v1719
        %2013 = vmatmul.f32.gmra.mxu0 %v1714
        %v2014 = vpop.f32.mrf.mxu0
        %v2015 = vadd.f32 %v1899, %v2014
        %2016 = vdwg.mxu0
        %2017 = vmatpush.msra.mxu0 %v1885
        %2018 = vmatpush.msra.mxu0 %v1874
        %2019 = vmatpush.msra.mxu0 %v1863
        %2020 = vmatpush.msra.mxu0 %v1852
        %2021 = vmatpush.msra.mxu0 %v1841
        %2022 = vmatpush.msra.mxu0 %v1830
        %2023 = vmatpush.msra.mxu0 %v1819
        %2024 = vmatpush.msra.mxu0 %v1808
        %2025 = vmatpush.msra.mxu0 %v1797
        %2026 = vmatpush.msra.mxu0 %v1786
        %2027 = vmatpush.msra.mxu0 %v1775
        %2028 = vmatpush.msra.mxu0 %v1764
        %2029 = vmatpush.msra.mxu0 %v1753
        %2030 = vmatpush.msra.mxu0 %v1742
        %2031 = vmatpush.msra.mxu0 %v1731
        %2032 = vmatpush.msra.mxu0 %v1720
        %2033 = vmatmul.f32.gmra.mxu0 %v1714
        %v2034 = vpop.f32.mrf.mxu0
        %v2035 = vadd.f32 %v1900, %v2034
        %2036 = vdwg.mxu0
        %2037 = vmatpush.msra.mxu0 %v1886
        %2038 = vmatpush.msra.mxu0 %v1875
        %2039 = vmatpush.msra.mxu0 %v1864
        %2040 = vmatpush.msra.mxu0 %v1853
        %2041 = vmatpush.msra.mxu0 %v1842
        %2042 = vmatpush.msra.mxu0 %v1831
        %2043 = vmatpush.msra.mxu0 %v1820
        %2044 = vmatpush.msra.mxu0 %v1809
        %2045 = vmatpush.msra.mxu0 %v1798
        %2046 = vmatpush.msra.mxu0 %v1787
        %2047 = vmatpush.msra.mxu0 %v1776
        %2048 = vmatpush.msra.mxu0 %v1765
        %2049 = vmatpush.msra.mxu0 %v1754
        %2050 = vmatpush.msra.mxu0 %v1743
        %2051 = vmatpush.msra.mxu0 %v1732
        %2052 = vmatpush.msra.mxu0 %v1721
        %2053 = vmatmul.f32.gmra.mxu0 %v1714
        %v2054 = vpop.f32.mrf.mxu0
        %v2055 = vadd.f32 %v1901, %v2054
        %2056 = vdwg.mxu0
        %2057 = vmatpush.msra.mxu0 %v1887
        %2058 = vmatpush.msra.mxu0 %v1876
        %2059 = vmatpush.msra.mxu0 %v1865
        %2060 = vmatpush.msra.mxu0 %v1854
        %2061 = vmatpush.msra.mxu0 %v1843
        %2062 = vmatpush.msra.mxu0 %v1832
        %2063 = vmatpush.msra.mxu0 %v1821
        %2064 = vmatpush.msra.mxu0 %v1810
        %2065 = vmatpush.msra.mxu0 %v1799
        %2066 = vmatpush.msra.mxu0 %v1788
        %2067 = vmatpush.msra.mxu0 %v1777
        %2068 = vmatpush.msra.mxu0 %v1766
        %2069 = vmatpush.msra.mxu0 %v1755
        %2070 = vmatpush.msra.mxu0 %v1744
        %2071 = vmatpush.msra.mxu0 %v1733
        %2072 = vmatpush.msra.mxu0 %v1722
        %2073 = vmatmul.f32.gmra.mxu0 %v1714
        %v2074 = vpop.f32.mrf.mxu0
        %v2075 = vadd.f32 %v1902, %v2074
        %2076 = vdwg.mxu0
        %2077 = vmatpush.msra.mxu0 %v1888
        %2078 = vmatpush.msra.mxu0 %v1877
        %2079 = vmatpush.msra.mxu0 %v1866
        %2080 = vmatpush.msra.mxu0 %v1855
        %2081 = vmatpush.msra.mxu0 %v1844
        %2082 = vmatpush.msra.mxu0 %v1833
        %2083 = vmatpush.msra.mxu0 %v1822
        %2084 = vmatpush.msra.mxu0 %v1811
        %2085 = vmatpush.msra.mxu0 %v1800
        %2086 = vmatpush.msra.mxu0 %v1789
        %2087 = vmatpush.msra.mxu0 %v1778
        %2088 = vmatpush.msra.mxu0 %v1767
        %2089 = vmatpush.msra.mxu0 %v1756
        %2090 = vmatpush.msra.mxu0 %v1745
        %2091 = vmatpush.msra.mxu0 %v1734
        %2092 = vmatpush.msra.mxu0 %v1723
        %2093 = vmatmul.f32.gmra.mxu0 %v1714
        %v2094 = vpop.f32.mrf.mxu0
        %v2095 = vadd.f32 %v1903, %v2094
        %2096 = vdwg.mxu0
        %2097 = vmatpush.msra.mxu0 %v1889
        %2098 = vmatpush.msra.mxu0 %v1878
        %2099 = vmatpush.msra.mxu0 %v1867
        %2100 = vmatpush.msra.mxu0 %v1856
        %2101 = vmatpush.msra.mxu0 %v1845
        %2102 = vmatpush.msra.mxu0 %v1834
        %2103 = vmatpush.msra.mxu0 %v1823
        %2104 = vmatpush.msra.mxu0 %v1812
        %2105 = vmatpush.msra.mxu0 %v1801
        %2106 = vmatpush.msra.mxu0 %v1790
        %2107 = vmatpush.msra.mxu0 %v1779
        %2108 = vmatpush.msra.mxu0 %v1768
        %2109 = vmatpush.msra.mxu0 %v1757
        %2110 = vmatpush.msra.mxu0 %v1746
        %2111 = vmatpush.msra.mxu0 %v1735
        %2112 = vmatpush.msra.mxu0 %v1724
        %2113 = vmatmul.f32.gmra.mxu0 %v1714
        %v2114 = vpop.f32.mrf.mxu0
        %v2115 = vadd.f32 %v1904, %v2114
        %2116 = vdwg.mxu0
        %2117 = vmatpush.msra.mxu0 %v1890
        %2118 = vmatpush.msra.mxu0 %v1879
        %2119 = vmatpush.msra.mxu0 %v1868
        %2120 = vmatpush.msra.mxu0 %v1857
        %2121 = vmatpush.msra.mxu0 %v1846
        %2122 = vmatpush.msra.mxu0 %v1835
        %2123 = vmatpush.msra.mxu0 %v1824
        %2124 = vmatpush.msra.mxu0 %v1813
        %2125 = vmatpush.msra.mxu0 %v1802
        %2126 = vmatpush.msra.mxu0 %v1791
        %2127 = vmatpush.msra.mxu0 %v1780
        %2128 = vmatpush.msra.mxu0 %v1769
        %2129 = vmatpush.msra.mxu0 %v1758
        %2130 = vmatpush.msra.mxu0 %v1747
        %2131 = vmatpush.msra.mxu0 %v1736
        %2132 = vmatpush.msra.mxu0 %v1725
        %2133 = vmatmul.f32.gmra.mxu0 %v1714
        %v2134 = vpop.f32.mrf.mxu0
        %v2135 = vadd.f32 %v1905, %v2134
        %2136 = vdwg.mxu0
        %2137 = vst [vmem:[%s440] sm:$0xff] %v1935
        %2138 = vst [vmem:[%s440 + $0x8] sm:$0xff] %v1955
        %2139 = vst [vmem:[%s440 + $0x10] sm:$0xff] %v1975
        %2140 = vst [vmem:[%s440 + $0x18] sm:$0xff] %v1995
        %2141 = vst [vmem:[%s440 + $0x20] sm:$0xff] %v2015
        %2142 = vst [vmem:[%s440 + $0x28] sm:$0xff] %v2035
        %2143 = vst [vmem:[%s440 + $0x30] sm:$0xff] %v2055
        %2144 = vst [vmem:[%s440 + $0x38] sm:$0xff] %v2075
        %2145 = vst [vmem:[%s440 + $0x40] sm:$0xff] %v2095
        %2146 = vst [vmem:[%s440 + $0x48] sm:$0xff] %v2115
        %2147 = vst [vmem:[%s440 + $0x50] sm:$0xff] %v2135
        %s2148 = smul.u32 11, %s26
        %p2149 = scmp.lt.s32.totalorder %s25, 0
        %s2150 = scalar_select %p2149, %s25, 0
        %p2151 = scmp.lt.s32.totalorder %s2148, 32
        %s2152 = scalar_select %p2151, %s2148, 32
        %s2153 = smul.addr %s2150, 33
        %s2154 = sadd.s32 %s2152, %s2153
        %s2155 = smul.addr %s2154, 8
        %s2156 = scalar_lea.vmem %s7, %s2155
        // Predicated region
        $region77: #{chess_qnetwork_naive_forward.1} parent=47 // pred_check
          %p2157 = pneg %p215
        $region78: #{chess_qnetwork_naive_forward.1} parent=47 // pred_check_branch
          %2159 = sbr.rel (%p2157) target = $region80
        $region79: #{chess_qnetwork_naive_forward.1} parent=47 // pred_region
          %s2160 = smul.u32 11, %s26
        $region80: #{chess_qnetwork_naive_forward.1} parent=47 // pred_fallthru
          _
      $region48: #{chess_qnetwork_naive_forward.1} parent=5 // pred_fallthru
        _
      %p2161 = scmp.le.s32.totalorder 2, %s16
      // Predicated region
      $region81: #{chess_qnetwork_naive_forward.1} parent=5 // pred_check
        %p2162 = pneg %p2161
      $region82: #{chess_qnetwork_naive_forward.1} parent=5 // pred_check_branch
        %2164 = sbr.rel (%p2162) target = $region84
      $region83: #{chess_qnetwork_naive_forward.1} parent=5 // pred_region
        %s2165 = ssub.s32 %s16, 2
        // Predicated region
        $region85: #{chess_qnetwork_naive_forward.1} parent=83 // pred_check
          %p2166 = pneg %p221
        $region86: #{chess_qnetwork_naive_forward.1} parent=83 // pred_check_branch
          %2168 = sbr.rel (%p2166) target = $region88
        $region87: #{chess_qnetwork_naive_forward.1} parent=83 // pred_region
          %s2169 = smul.u32 11, %s28
          %p2170 = scmp.lt.s32.totalorder %s27, 0
          %s2171 = scalar_select %p2170, %s27, 0
          %p2172 = scmp.lt.s32.totalorder %s2169, 32
          %s2173 = scalar_select %p2172, %s2169, 32
          %s2174 = smul.addr %s2171, 33
          %s2175 = sadd.s32 %s2173, %s2174
          %s2176 = smul.addr %s2175, 8
          %s2177 = scalar_lea.vmem %s7, %s2176
        $region88: #{chess_qnetwork_naive_forward.1} parent=83 // pred_fallthru
          _
      $region84: #{chess_qnetwork_naive_forward.1} parent=5 // pred_fallthru
        _
    $region6: #{chess_qnetwork_naive_forward.1} parent=1 // loop_footer
      %s20 = sadd.s32 1, %s16
    $region7: #{chess_qnetwork_naive_forward.1} parent=1 // loop_footer_branch
      %15 = sbr.rel target = $region3
    $region8: #{chess_qnetwork_naive_forward.1} parent=1 // loop_exit
      _
    %2178 = vsyncpa [#allocation4], 1
    %s2179 = scalar_lea.sflag [#allocation4], 1
    %2180 = vsyncpa %s2179, 1
    %2181 = vsyncpa [#allocation6], 1
    %2182 = vsyncpa [#allocation9], 1

</llo_original>
